<compile_context>
chip_gen: v5e
topology: v5e:2x2
jax: 0.10.0
libtpu: 0.0.40
codegen_flags: <defaults>
</compile_context>

<pallas_src>
import functools

import jax
import jax.numpy as jnp
from jax import lax
from jax.experimental import pallas as pl
from jax.experimental.pallas import tpu as pltpu
import numpy as np


def _round_up(x, m):
    return ((x + m - 1) // m) * m


def decoder_rnn_kernel(emb_ref, base_ref, we_ref, wh_ref, wo_ref, bo_ref,
                       dists_ref, commit_ref):
    """Whole decode loop (highway LSTM cell + classifier + argmax feedback)."""
    B = base_ref.shape[0]
    H = wh_ref.shape[0]                 # hidden size
    Cp = wo_ref.shape[1]                # padded number of classes (lane-dense)
    n_embed_rows, E = emb_ref.shape     # (num_classes + 1, embed_dim)
    num_iter = dists_ref.shape[0]

    # --- loop-invariant loads / iotas, hoisted out of the decode loop -------
    base = base_ref[...]                # (B, Gp): x@Wx + b_in + b_state (padded)
    we = we_ref[...]                    # (E, Gp) gate-stacked embed weights
    wh = wh_ref[...]                    # (H, Gp) gate-stacked state weights (gate 5 = 0)
    wo = wo_ref[...]                    # (H, Cp) classifier
    bo = bo_ref[...]                    # (1, Cp) classifier bias (-1e30 in pad)
    emb = emb_ref[...]                  # (C+1, E) obj_embed table (row 0 = 'start')
    col = lax.broadcasted_iota(jnp.int32, (B, Cp), 1)
    emb_col = lax.broadcasted_iota(jnp.int32, (B, n_embed_rows), 1)

    # --- initial state: zeros; previous_embed = obj_embed.weight[0] ---------
    h = jnp.zeros((B, H), jnp.float32)
    c = jnp.zeros((B, H), jnp.float32)
    pe = jnp.broadcast_to(emb[0:1, :], (B, E))

    # num_iter is static -> fully unrolled decode loop inside one invocation
    for i in range(num_iter):
        # z[:, k*H:(k+1)*H] == x@Wx_k + pe@We_k + b_in_k + h@Wh_k + b_state_k
        z = (base
             + jnp.dot(pe, we, preferred_element_type=jnp.float32)
             + jnp.dot(h, wh, preferred_element_type=jnp.float32))

        input_gate = jax.nn.sigmoid(z[:, 0 * H:1 * H])
        forget_gate = jax.nn.sigmoid(z[:, 1 * H:2 * H])
        memory_init = jnp.tanh(z[:, 2 * H:3 * H])
        output_gate = jax.nn.sigmoid(z[:, 3 * H:4 * H])
        c = input_gate * memory_init + forget_gate * c
        out = output_gate * jnp.tanh(c)

        # highway gate (gate 5 of z has no state / state-bias contribution)
        highway_gate = jax.nn.sigmoid(z[:, 4 * H:5 * H])
        out = highway_gate * out + (1.0 - highway_gate) * z[:, 5 * H:6 * H]

        # classifier (lane-dense padded width Cp)
        pred = jnp.dot(out, wo, preferred_element_type=jnp.float32) + bo

        # argmax over classes (softmax is monotone -> same index); padded
        # columns carry a -1e30 bias so they can never win.
        mx = jnp.max(pred, axis=1, keepdims=True)
        best = jnp.min(jnp.where(pred == mx, col, Cp), axis=1, keepdims=True)

        dists_ref[i] = pred
        commit_ref[i] = best

        # next embedding: obj_embed(best + 1) via one-hot matmul
        onehot = (emb_col == (best + 1)).astype(jnp.float32)     # (B, C+1)
        pe = jnp.dot(onehot, emb, preferred_element_type=jnp.float32)
        h = out


@functools.partial(jax.jit, static_argnames=("num_iter",))
def decoder_rnn_forward(seq, emb_table, wx, we, bi, wh, bh, wo, bo, *, num_iter):
    B, D_in = seq.shape
    H = wh.shape[-1]
    C = wo.shape[-1]
    E = emb_table.shape[1]
    G = 6 * H
    Gp = _round_up(G, 128)              # lane-dense gate slab width
    Cp = _round_up(C, 128)              # lane-dense classifier width

    # --- gate-stacked weight layout: gate k lives in cols [k*H, (k+1)*H) ----
    wx_s = jnp.transpose(wx, (1, 0, 2)).reshape(D_in, G)     # (D_in, 6H)
    we_s = jnp.transpose(we, (1, 0, 2)).reshape(E, G)        # (E,    6H)
    wh_s = jnp.transpose(wh, (1, 0, 2)).reshape(H, 5 * H)    # (H,    5H)
    bi_s = bi.reshape(1, G)
    bh_s = bh.reshape(1, 5 * H)

    # --- loop-invariant x projection + both biases, padded to Gp ------------
    # (gate 5 = highway input projection has no state-linearity bias)
    base = seq @ wx_s + bi_s
    base = base.at[:, :5 * H].add(bh_s)
    base = jnp.pad(base, ((0, 0), (0, Gp - G)))
    we_p = jnp.pad(we_s, ((0, 0), (0, Gp - G)))
    wh_p = jnp.pad(wh_s, ((0, 0), (0, Gp - 5 * H)))

    # --- classifier padded to lane-dense width; padded logits -> -1e30 ------
    wo_p = jnp.pad(wo, ((0, 0), (0, Cp - C)))
    bo_p = jnp.pad(bo.reshape(1, C), ((0, 0), (0, Cp - C)),
                   constant_values=-1e30)

    dists, commits = pl.pallas_call(
        decoder_rnn_kernel,
        out_shape=(jax.ShapeDtypeStruct((num_iter, B, Cp), jnp.float32),
                   jax.ShapeDtypeStruct((num_iter, B, 1), jnp.int32)),
        grid_spec=pltpu.PrefetchScalarGridSpec(
            num_scalar_prefetch=0,
            grid=(1,),                                   # single invocation
            in_specs=[
                pl.BlockSpec(emb_table.shape, lambda i: (0, 0)),
                pl.BlockSpec((B, Gp), lambda i: (0, 0)),
                pl.BlockSpec((E, Gp), lambda i: (0, 0)),
                pl.BlockSpec((H, Gp), lambda i: (0, 0)),
                pl.BlockSpec((H, Cp), lambda i: (0, 0)),
                pl.BlockSpec((1, Cp), lambda i: (0, 0)),
            ],
            out_specs=[
                pl.BlockSpec((num_iter, B, Cp), lambda i: (0, 0, 0)),
                pl.BlockSpec((num_iter, B, 1), lambda i: (0, 0, 0)),
            ],
        ),
        compiler_params=pltpu.CompilerParams(
            dimension_semantics=("arbitrary",)),
    )(emb_table, base, we_p, wh_p, wo_p, bo_p)

    return dists[..., :C], commits[..., 0]        # (num_iter,B,C), (num_iter,B)


def reference_forward(seq, emb_table, wx, we, bi, wh, bh, wo, bo, num_iter):
    """Pure-JAX mirror of the torch forward (eval mode), for a sanity check."""
    B = seq.shape[0]
    H = wh.shape[-1]
    h = jnp.zeros((B, H), jnp.float32)
    c = jnp.zeros((B, H), jnp.float32)
    pe = jnp.broadcast_to(emb_table[0:1, :], (B, emb_table.shape[1]))
    dists, commits = [], []
    for _ in range(num_iter):
        pi = [seq @ wx[k] + pe @ we[k] + bi[k] for k in range(6)]
        ps = [h @ wh[k] + bh[k] for k in range(5)]
        ig = jax.nn.sigmoid(pi[0] + ps[0])
        fg = jax.nn.sigmoid(pi[1] + ps[1])
        mi = jnp.tanh(pi[2] + ps[2])
        og = jax.nn.sigmoid(pi[3] + ps[3])
        c = ig * mi + fg * c
        out = og * jnp.tanh(c)
        hg = jax.nn.sigmoid(pi[4] + ps[4])
        out = hg * out + (1.0 - hg) * pi[5]
        pred = out @ wo + bo
        best = jnp.argmax(pred, axis=1)
        dists.append(pred)
        commits.append(best)
        h = out
        pe = emb_table[best + 1]
    return jnp.stack(dists), jnp.stack(commits)


if __name__ == "__main__":
    # ---- small, deterministic configuration --------------------------------
    B = 8                 # batch (number of objects)
    inputs_dim = 64       # self.inputs_dim
    embed_dim = 100       # obj_edge_vectors wv_dim (previous_embed is 100-d)
    hidden_dim = 32       # self.hidden_size
    num_classes = 8       # len(self.classes)
    num_rels = 6          # len(self.rel_classes)
    num_iter = 4          # self.num_iter
    num_rel_pairs = 5
    input_size = inputs_dim + embed_dim

    key = jax.random.PRNGKey(0)
    ks = jax.random.split(key, 10)

    seq = jax.random.normal(ks[0], (B, inputs_dim), jnp.float32)

    # obj_embed.weight <- embed_vecs for ['start'] + classes  -> (C+1, 100)
    emb_table = jax.random.normal(ks[1], (num_classes + 1, embed_dim), jnp.float32) * 0.5

    # input_linearity: Linear(input_size, 6H). Stored gate-stacked and split into
    # the sequence part (first inputs_dim cols) and the embedding part.
    w_in = jax.random.normal(ks[2], (6, input_size, hidden_dim), jnp.float32) * (
        1.0 / np.sqrt(input_size))
    wx = w_in[:, :inputs_dim, :]                      # (6, inputs_dim, H)
    we = w_in[:, inputs_dim:, :]                      # (6, embed_dim, H)
    bi = jnp.zeros((6, 1, hidden_dim), jnp.float32)   # use_input_projection_bias

    # state_linearity: Linear(H, 5H); bias zero except forget-gate chunk = 1.0
    wh = jax.random.normal(ks[3], (5, hidden_dim, hidden_dim), jnp.float32) * (
        1.0 / np.sqrt(hidden_dim))
    bh = jnp.zeros((5, 1, hidden_dim), jnp.float32).at[1].set(1.0)

    # out: Linear(H, num_classes)
    wo = jax.random.normal(ks[4], (hidden_dim, num_classes), jnp.float32) * (
        1.0 / np.sqrt(hidden_dim))
    bo = jax.random.normal(ks[5], (1, num_classes), jnp.float32) * 0.1

    # synthetic prob_matrix, normalized like __init__ (glue / lookup table)
    pm = jax.random.uniform(ks[6], (num_classes, num_classes, num_rels), jnp.float32)
    pm = pm.at[:, :, 0].add(1.0)
    pm = pm / jnp.sum(pm, axis=2, keepdims=True)
    prob_matrix = pm.at[:, :, 0].set(0.0)

    rel_inds = jax.random.randint(ks[7], (num_rel_pairs, 3), 0, B, jnp.int32)

    # ---- run the Pallas kernel ---------------------------------------------
    out_dists_list, out_commitments_list = decoder_rnn_forward(
        seq, emb_table, wx, we, bi, wh, bh, wo, bo, num_iter=num_iter)
    out_dists_list = jax.block_until_ready(out_dists_list)
    out_commitments_list = jax.block_until_ready(out_commitments_list)

    out_dists = out_dists_list[-1]                    # (B, num_classes)
    out_commitments = out_commitments_list[-1]        # (B,)

    # get_simple_rel_dist: pure gather into prob_matrix (plain-JAX glue)
    o1 = out_commitments[rel_inds[:, 1]]
    o2 = out_commitments[rel_inds[:, 2]]
    rel_dists = prob_matrix[o1, o2]                   # (num_rel_pairs, num_rels)
    rel_dists = jax.block_until_ready(rel_dists)

    # ---- light sanity check vs. pure-JAX reference (first iteration only,
    #      which has no argmax-feedback dependence) ---------------------------
    ref_dists, _ = reference_forward(seq, emb_table, wx, we, bi, wh, bh, wo, bo,
                                     num_iter)
    np.testing.assert_allclose(np.asarray(out_dists_list[0]),
                               np.asarray(ref_dists[0]), rtol=2e-2, atol=2e-2)

    assert out_dists_list.shape == (num_iter, B, num_classes)
    assert out_commitments_list.shape == (num_iter, B)
    assert rel_dists.shape == (num_rel_pairs, num_rels)
    assert bool(jnp.all(jnp.isfinite(out_dists_list)))
    assert bool(jnp.all(jnp.isfinite(rel_dists)))
    assert bool(jnp.all(out_commitments_list >= 0))
    assert bool(jnp.all(out_commitments_list < num_classes))

    print("KERNEL_OK")
</pallas_src>

<mosaic_0001>
module attributes {stable_mosaic.version = 11 : i64} {
  func.func @decoder_rnn_kernel(%arg0: i32, %arg1: memref<9x100xf32, #tpu.memory_space<vmem>>, %arg2: memref<8x256xf32, #tpu.memory_space<vmem>>, %arg3: memref<100x256xf32, #tpu.memory_space<vmem>>, %arg4: memref<32x256xf32, #tpu.memory_space<vmem>>, %arg5: memref<32x128xf32, #tpu.memory_space<vmem>>, %arg6: memref<1x128xf32, #tpu.memory_space<vmem>>, %arg7: memref<4x8x128xf32, #tpu.memory_space<vmem>>, %arg8: memref<4x8x1xi32, #tpu.memory_space<vmem>>) attributes {dimension_semantics = [#tpu.dimension_semantics<arbitrary>], iteration_bounds = array<i64: 1>, scalar_prefetch = 0 : i64, scratch_operands = 0 : i64, tpu.core_type = #tpu.core_type<tc>, window_params = [{pipeline_mode = #tpu.pipeline_mode<synchronous>, transform_indices = @transform_0, window_bounds = array<i64: 9, 100>}, {pipeline_mode = #tpu.pipeline_mode<synchronous>, transform_indices = @transform_1, window_bounds = array<i64: 8, 256>}, {pipeline_mode = #tpu.pipeline_mode<synchronous>, transform_indices = @transform_2, window_bounds = array<i64: 100, 256>}, {pipeline_mode = #tpu.pipeline_mode<synchronous>, transform_indices = @transform_3, window_bounds = array<i64: 32, 256>}, {pipeline_mode = #tpu.pipeline_mode<synchronous>, transform_indices = @transform_4, window_bounds = array<i64: 32, 128>}, {pipeline_mode = #tpu.pipeline_mode<synchronous>, transform_indices = @transform_5, window_bounds = array<i64: 1, 128>}, {pipeline_mode = #tpu.pipeline_mode<synchronous>, transform_indices = @transform_6, window_bounds = array<i64: 4, 8, 128>}, {pipeline_mode = #tpu.pipeline_mode<synchronous>, transform_indices = @transform_7, window_bounds = array<i64: 4, 8, 1>}]} {
    %c0 = arith.constant 0 : index
    %c0_0 = arith.constant 0 : index
    %0 = vector.load %arg2[%c0, %c0_0] : memref<8x256xf32, #tpu.memory_space<vmem>>, vector<8x256xf32>
    %c0_1 = arith.constant 0 : index
    %c0_2 = arith.constant 0 : index
    %1 = vector.load %arg3[%c0_1, %c0_2] : memref<100x256xf32, #tpu.memory_space<vmem>>, vector<100x256xf32>
    %c0_3 = arith.constant 0 : index
    %c0_4 = arith.constant 0 : index
    %2 = vector.load %arg4[%c0_3, %c0_4] : memref<32x256xf32, #tpu.memory_space<vmem>>, vector<32x256xf32>
    %c0_5 = arith.constant 0 : index
    %c0_6 = arith.constant 0 : index
    %3 = vector.load %arg5[%c0_5, %c0_6] : memref<32x128xf32, #tpu.memory_space<vmem>>, vector<32x128xf32>
    %c0_7 = arith.constant 0 : index
    %c0_8 = arith.constant 0 : index
    %4 = vector.load %arg6[%c0_7, %c0_8] : memref<1x128xf32, #tpu.memory_space<vmem>>, vector<1x128xf32>
    %c0_9 = arith.constant 0 : index
    %c0_10 = arith.constant 0 : index
    %5 = vector.load %arg1[%c0_9, %c0_10] : memref<9x100xf32, #tpu.memory_space<vmem>>, vector<9x100xf32>
    %6 = tpu.iota {dimensions = array<i32: 1>} : vector<8x128xi32>
    %7 = tpu.iota {dimensions = array<i32: 1>} : vector<8x9xi32>
    %cst = arith.constant 0.000000e+00 : f32
    %8 = vector.broadcast %cst : f32 to vector<8x32xf32>
    %cst_11 = arith.constant 0.000000e+00 : f32
    %9 = vector.broadcast %cst_11 : f32 to vector<8x32xf32>
    %10 = vector.extract_strided_slice %5 {offsets = [0, 0], sizes = [1, 100], strides = [1, 1]} : vector<9x100xf32> to vector<1x100xf32>
    %11 = vector.shape_cast %10 : vector<1x100xf32> to vector<1x100xf32>
    %12 = vector.broadcast %11 : vector<1x100xf32> to vector<8x100xf32>
    %cst_12 = arith.constant dense<0.000000e+00> : vector<8x256xf32>
    %13 = tpu.matmul %12, %1, %cst_12 {dimension_numbers = #tpu.dot_dimension_numbers<[1], [0], [0], [1], [0, 0, 1, 1], [], []>} : vector<8x100xf32>, vector<100x256xf32>, vector<8x256xf32> -> vector<8x256xf32>
    %14 = arith.addf %0, %13 : vector<8x256xf32>
    %cst_13 = arith.constant dense<0.000000e+00> : vector<8x256xf32>
    %15 = tpu.matmul %8, %2, %cst_13 {dimension_numbers = #tpu.dot_dimension_numbers<[1], [0], [0], [1], [0, 0, 1, 1], [], []>} : vector<8x32xf32>, vector<32x256xf32>, vector<8x256xf32> -> vector<8x256xf32>
    %16 = arith.addf %14, %15 : vector<8x256xf32>
    %17 = vector.extract_strided_slice %16 {offsets = [0, 0], sizes = [8, 32], strides = [1, 1]} : vector<8x256xf32> to vector<8x32xf32>
    %18 = arith.negf %17 : vector<8x32xf32>
    %19 = math.exp %18 : vector<8x32xf32>
    %cst_14 = arith.constant 1.000000e+00 : f32
    %20 = vector.broadcast %cst_14 : f32 to vector<8x32xf32>
    %21 = arith.addf %20, %19 : vector<8x32xf32>
    %22 = arith.divf %20, %21 : vector<8x32xf32>
    %23 = vector.extract_strided_slice %16 {offsets = [0, 32], sizes = [8, 32], strides = [1, 1]} : vector<8x256xf32> to vector<8x32xf32>
    %24 = arith.negf %23 : vector<8x32xf32>
    %25 = math.exp %24 : vector<8x32xf32>
    %cst_15 = arith.constant 1.000000e+00 : f32
    %26 = vector.broadcast %cst_15 : f32 to vector<8x32xf32>
    %27 = arith.addf %26, %25 : vector<8x32xf32>
    %28 = arith.divf %26, %27 : vector<8x32xf32>
    %29 = vector.extract_strided_slice %16 {offsets = [0, 64], sizes = [8, 32], strides = [1, 1]} : vector<8x256xf32> to vector<8x32xf32>
    %30 = math.tanh %29 : vector<8x32xf32>
    %31 = vector.extract_strided_slice %16 {offsets = [0, 96], sizes = [8, 32], strides = [1, 1]} : vector<8x256xf32> to vector<8x32xf32>
    %32 = arith.negf %31 : vector<8x32xf32>
    %33 = math.exp %32 : vector<8x32xf32>
    %cst_16 = arith.constant 1.000000e+00 : f32
    %34 = vector.broadcast %cst_16 : f32 to vector<8x32xf32>
    %35 = arith.addf %34, %33 : vector<8x32xf32>
    %36 = arith.divf %34, %35 : vector<8x32xf32>
    %37 = arith.mulf %22, %30 : vector<8x32xf32>
    %38 = arith.mulf %28, %9 : vector<8x32xf32>
    %39 = arith.addf %37, %38 : vector<8x32xf32>
    %40 = math.tanh %39 : vector<8x32xf32>
    %41 = arith.mulf %36, %40 : vector<8x32xf32>
    %42 = vector.extract_strided_slice %16 {offsets = [0, 128], sizes = [8, 32], strides = [1, 1]} : vector<8x256xf32> to vector<8x32xf32>
    %43 = arith.negf %42 : vector<8x32xf32>
    %44 = math.exp %43 : vector<8x32xf32>
    %cst_17 = arith.constant 1.000000e+00 : f32
    %45 = vector.broadcast %cst_17 : f32 to vector<8x32xf32>
    %46 = arith.addf %45, %44 : vector<8x32xf32>
    %47 = arith.divf %45, %46 : vector<8x32xf32>
    %48 = arith.mulf %47, %41 : vector<8x32xf32>
    %cst_18 = arith.constant 1.000000e+00 : f32
    %49 = vector.broadcast %cst_18 : f32 to vector<8x32xf32>
    %50 = arith.subf %49, %47 : vector<8x32xf32>
    %51 = vector.extract_strided_slice %16 {offsets = [0, 160], sizes = [8, 32], strides = [1, 1]} : vector<8x256xf32> to vector<8x32xf32>
    %52 = arith.mulf %50, %51 : vector<8x32xf32>
    %53 = arith.addf %48, %52 : vector<8x32xf32>
    %cst_19 = arith.constant dense<0.000000e+00> : vector<8x128xf32>
    %54 = tpu.matmul %53, %3, %cst_19 {dimension_numbers = #tpu.dot_dimension_numbers<[1], [0], [0], [1], [0, 0, 1, 1], [], []>} : vector<8x32xf32>, vector<32x128xf32>, vector<8x128xf32> -> vector<8x128xf32>
    %55 = vector.broadcast %4 : vector<1x128xf32> to vector<8x128xf32>
    %56 = arith.addf %54, %55 : vector<8x128xf32>
    %cst_20 = arith.constant dense<0xFF800000> : vector<8xf32>
    %57 = vector.multi_reduction <maximumf>, %56, %cst_20 [1] : vector<8x128xf32> to vector<8xf32>
    %58 = vector.shape_cast %57 : vector<8xf32> to vector<8x1xf32>
    %59 = vector.broadcast %58 : vector<8x1xf32> to vector<8x128xf32>
    %60 = arith.cmpf oeq, %56, %59 : vector<8x128xf32>
    %c128_i32 = arith.constant 128 : i32
    %61 = vector.broadcast %c128_i32 : i32 to vector<8x128xi32>
    %62 = arith.select %60, %6, %61 : vector<8x128xi1>, vector<8x128xi32>
    %cst_21 = arith.constant dense<2147483647> : vector<8xi32>
    %63 = vector.multi_reduction <minsi>, %62, %cst_21 [1] : vector<8x128xi32> to vector<8xi32>
    %64 = vector.shape_cast %63 : vector<8xi32> to vector<8x1xi32>
    %c0_22 = arith.constant 0 : index
    %c0_23 = arith.constant 0 : index
    %c0_24 = arith.constant 0 : index
    %65 = vector.load %arg7[%c0_22, %c0_23, %c0_24] : memref<4x8x128xf32, #tpu.memory_space<vmem>>, vector<1x8x128xf32>
    %66 = vector.shape_cast %65 : vector<1x8x128xf32> to vector<8x128xf32>
    %67 = vector.shape_cast %56 : vector<8x128xf32> to vector<1x8x128xf32>
    tpu.vector_store %arg7[%c0_22, %c0_23, %c0_24], %67 {strides = array<i32>} : memref<4x8x128xf32, #tpu.memory_space<vmem>>, vector<1x8x128xf32>,
    %c0_25 = arith.constant 0 : index
    %c0_26 = arith.constant 0 : index
    %c0_27 = arith.constant 0 : index
    %68 = vector.load %arg8[%c0_25, %c0_26, %c0_27] : memref<4x8x1xi32, #tpu.memory_space<vmem>>, vector<1x8x1xi32>
    %69 = vector.shape_cast %68 : vector<1x8x1xi32> to vector<8x1xi32>
    %70 = vector.shape_cast %64 : vector<8x1xi32> to vector<1x8x1xi32>
    tpu.vector_store %arg8[%c0_25, %c0_26, %c0_27], %70 {strides = array<i32>} : memref<4x8x1xi32, #tpu.memory_space<vmem>>, vector<1x8x1xi32>,
    %c1_i32 = arith.constant 1 : i32
    %71 = vector.broadcast %c1_i32 : i32 to vector<8x1xi32>
    %72 = arith.addi %64, %71 : vector<8x1xi32>
    %73 = vector.broadcast %72 : vector<8x1xi32> to vector<8x9xi32>
    %74 = arith.cmpi eq, %7, %73 : vector<8x9xi32>
    %75 = arith.extui %74 : vector<8x9xi1> to vector<8x9xi32>
    %76 = arith.sitofp %75 : vector<8x9xi32> to vector<8x9xf32>
    %cst_28 = arith.constant dense<0.000000e+00> : vector<8x100xf32>
    %77 = tpu.matmul %76, %5, %cst_28 {dimension_numbers = #tpu.dot_dimension_numbers<[1], [0], [0], [1], [0, 0, 1, 1], [], []>} : vector<8x9xf32>, vector<9x100xf32>, vector<8x100xf32> -> vector<8x100xf32>
    %cst_29 = arith.constant dense<0.000000e+00> : vector<8x256xf32>
    %78 = tpu.matmul %77, %1, %cst_29 {dimension_numbers = #tpu.dot_dimension_numbers<[1], [0], [0], [1], [0, 0, 1, 1], [], []>} : vector<8x100xf32>, vector<100x256xf32>, vector<8x256xf32> -> vector<8x256xf32>
    %79 = arith.addf %0, %78 : vector<8x256xf32>
    %cst_30 = arith.constant dense<0.000000e+00> : vector<8x256xf32>
    %80 = tpu.matmul %53, %2, %cst_30 {dimension_numbers = #tpu.dot_dimension_numbers<[1], [0], [0], [1], [0, 0, 1, 1], [], []>} : vector<8x32xf32>, vector<32x256xf32>, vector<8x256xf32> -> vector<8x256xf32>
    %81 = arith.addf %79, %80 : vector<8x256xf32>
    %82 = vector.extract_strided_slice %81 {offsets = [0, 0], sizes = [8, 32], strides = [1, 1]} : vector<8x256xf32> to vector<8x32xf32>
    %83 = arith.negf %82 : vector<8x32xf32>
    %84 = math.exp %83 : vector<8x32xf32>
    %cst_31 = arith.constant 1.000000e+00 : f32
    %85 = vector.broadcast %cst_31 : f32 to vector<8x32xf32>
    %86 = arith.addf %85, %84 : vector<8x32xf32>
    %87 = arith.divf %85, %86 : vector<8x32xf32>
    %88 = vector.extract_strided_slice %81 {offsets = [0, 32], sizes = [8, 32], strides = [1, 1]} : vector<8x256xf32> to vector<8x32xf32>
    %89 = arith.negf %88 : vector<8x32xf32>
    %90 = math.exp %89 : vector<8x32xf32>
    %cst_32 = arith.constant 1.000000e+00 : f32
    %91 = vector.broadcast %cst_32 : f32 to vector<8x32xf32>
    %92 = arith.addf %91, %90 : vector<8x32xf32>
    %93 = arith.divf %91, %92 : vector<8x32xf32>
    %94 = vector.extract_strided_slice %81 {offsets = [0, 64], sizes = [8, 32], strides = [1, 1]} : vector<8x256xf32> to vector<8x32xf32>
    %95 = math.tanh %94 : vector<8x32xf32>
    %96 = vector.extract_strided_slice %81 {offsets = [0, 96], sizes = [8, 32], strides = [1, 1]} : vector<8x256xf32> to vector<8x32xf32>
    %97 = arith.negf %96 : vector<8x32xf32>
    %98 = math.exp %97 : vector<8x32xf32>
    %cst_33 = arith.constant 1.000000e+00 : f32
    %99 = vector.broadcast %cst_33 : f32 to vector<8x32xf32>
    %100 = arith.addf %99, %98 : vector<8x32xf32>
    %101 = arith.divf %99, %100 : vector<8x32xf32>
    %102 = arith.mulf %87, %95 : vector<8x32xf32>
    %103 = arith.mulf %93, %39 : vector<8x32xf32>
    %104 = arith.addf %102, %103 : vector<8x32xf32>
    %105 = math.tanh %104 : vector<8x32xf32>
    %106 = arith.mulf %101, %105 : vector<8x32xf32>
    %107 = vector.extract_strided_slice %81 {offsets = [0, 128], sizes = [8, 32], strides = [1, 1]} : vector<8x256xf32> to vector<8x32xf32>
    %108 = arith.negf %107 : vector<8x32xf32>
    %109 = math.exp %108 : vector<8x32xf32>
    %cst_34 = arith.constant 1.000000e+00 : f32
    %110 = vector.broadcast %cst_34 : f32 to vector<8x32xf32>
    %111 = arith.addf %110, %109 : vector<8x32xf32>
    %112 = arith.divf %110, %111 : vector<8x32xf32>
    %113 = arith.mulf %112, %106 : vector<8x32xf32>
    %cst_35 = arith.constant 1.000000e+00 : f32
    %114 = vector.broadcast %cst_35 : f32 to vector<8x32xf32>
    %115 = arith.subf %114, %112 : vector<8x32xf32>
    %116 = vector.extract_strided_slice %81 {offsets = [0, 160], sizes = [8, 32], strides = [1, 1]} : vector<8x256xf32> to vector<8x32xf32>
    %117 = arith.mulf %115, %116 : vector<8x32xf32>
    %118 = arith.addf %113, %117 : vector<8x32xf32>
    %cst_36 = arith.constant dense<0.000000e+00> : vector<8x128xf32>
    %119 = tpu.matmul %118, %3, %cst_36 {dimension_numbers = #tpu.dot_dimension_numbers<[1], [0], [0], [1], [0, 0, 1, 1], [], []>} : vector<8x32xf32>, vector<32x128xf32>, vector<8x128xf32> -> vector<8x128xf32>
    %120 = vector.broadcast %4 : vector<1x128xf32> to vector<8x128xf32>
    %121 = arith.addf %119, %120 : vector<8x128xf32>
    %cst_37 = arith.constant dense<0xFF800000> : vector<8xf32>
    %122 = vector.multi_reduction <maximumf>, %121, %cst_37 [1] : vector<8x128xf32> to vector<8xf32>
    %123 = vector.shape_cast %122 : vector<8xf32> to vector<8x1xf32>
    %124 = vector.broadcast %123 : vector<8x1xf32> to vector<8x128xf32>
    %125 = arith.cmpf oeq, %121, %124 : vector<8x128xf32>
    %c128_i32_38 = arith.constant 128 : i32
    %126 = vector.broadcast %c128_i32_38 : i32 to vector<8x128xi32>
    %127 = arith.select %125, %6, %126 : vector<8x128xi1>, vector<8x128xi32>
    %cst_39 = arith.constant dense<2147483647> : vector<8xi32>
    %128 = vector.multi_reduction <minsi>, %127, %cst_39 [1] : vector<8x128xi32> to vector<8xi32>
    %129 = vector.shape_cast %128 : vector<8xi32> to vector<8x1xi32>
    %c1 = arith.constant 1 : index
    %c0_40 = arith.constant 0 : index
    %c0_41 = arith.constant 0 : index
    %130 = vector.load %arg7[%c1, %c0_40, %c0_41] : memref<4x8x128xf32, #tpu.memory_space<vmem>>, vector<1x8x128xf32>
    %131 = vector.shape_cast %130 : vector<1x8x128xf32> to vector<8x128xf32>
    %132 = vector.shape_cast %121 : vector<8x128xf32> to vector<1x8x128xf32>
    tpu.vector_store %arg7[%c1, %c0_40, %c0_41], %132 {strides = array<i32>} : memref<4x8x128xf32, #tpu.memory_space<vmem>>, vector<1x8x128xf32>,
    %c1_42 = arith.constant 1 : index
    %c0_43 = arith.constant 0 : index
    %c0_44 = arith.constant 0 : index
    %133 = vector.load %arg8[%c1_42, %c0_43, %c0_44] : memref<4x8x1xi32, #tpu.memory_space<vmem>>, vector<1x8x1xi32>
    %134 = vector.shape_cast %133 : vector<1x8x1xi32> to vector<8x1xi32>
    %135 = vector.shape_cast %129 : vector<8x1xi32> to vector<1x8x1xi32>
    tpu.vector_store %arg8[%c1_42, %c0_43, %c0_44], %135 {strides = array<i32>} : memref<4x8x1xi32, #tpu.memory_space<vmem>>, vector<1x8x1xi32>,
    %c1_i32_45 = arith.constant 1 : i32
    %136 = vector.broadcast %c1_i32_45 : i32 to vector<8x1xi32>
    %137 = arith.addi %129, %136 : vector<8x1xi32>
    %138 = vector.broadcast %137 : vector<8x1xi32> to vector<8x9xi32>
    %139 = arith.cmpi eq, %7, %138 : vector<8x9xi32>
    %140 = arith.extui %139 : vector<8x9xi1> to vector<8x9xi32>
    %141 = arith.sitofp %140 : vector<8x9xi32> to vector<8x9xf32>
    %cst_46 = arith.constant dense<0.000000e+00> : vector<8x100xf32>
    %142 = tpu.matmul %141, %5, %cst_46 {dimension_numbers = #tpu.dot_dimension_numbers<[1], [0], [0], [1], [0, 0, 1, 1], [], []>} : vector<8x9xf32>, vector<9x100xf32>, vector<8x100xf32> -> vector<8x100xf32>
    %cst_47 = arith.constant dense<0.000000e+00> : vector<8x256xf32>
    %143 = tpu.matmul %142, %1, %cst_47 {dimension_numbers = #tpu.dot_dimension_numbers<[1], [0], [0], [1], [0, 0, 1, 1], [], []>} : vector<8x100xf32>, vector<100x256xf32>, vector<8x256xf32> -> vector<8x256xf32>
    %144 = arith.addf %0, %143 : vector<8x256xf32>
    %cst_48 = arith.constant dense<0.000000e+00> : vector<8x256xf32>
    %145 = tpu.matmul %118, %2, %cst_48 {dimension_numbers = #tpu.dot_dimension_numbers<[1], [0], [0], [1], [0, 0, 1, 1], [], []>} : vector<8x32xf32>, vector<32x256xf32>, vector<8x256xf32> -> vector<8x256xf32>
    %146 = arith.addf %144, %145 : vector<8x256xf32>
    %147 = vector.extract_strided_slice %146 {offsets = [0, 0], sizes = [8, 32], strides = [1, 1]} : vector<8x256xf32> to vector<8x32xf32>
    %148 = arith.negf %147 : vector<8x32xf32>
    %149 = math.exp %148 : vector<8x32xf32>
    %cst_49 = arith.constant 1.000000e+00 : f32
    %150 = vector.broadcast %cst_49 : f32 to vector<8x32xf32>
    %151 = arith.addf %150, %149 : vector<8x32xf32>
    %152 = arith.divf %150, %151 : vector<8x32xf32>
    %153 = vector.extract_strided_slice %146 {offsets = [0, 32], sizes = [8, 32], strides = [1, 1]} : vector<8x256xf32> to vector<8x32xf32>
    %154 = arith.negf %153 : vector<8x32xf32>
    %155 = math.exp %154 : vector<8x32xf32>
    %cst_50 = arith.constant 1.000000e+00 : f32
    %156 = vector.broadcast %cst_50 : f32 to vector<8x32xf32>
    %157 = arith.addf %156, %155 : vector<8x32xf32>
    %158 = arith.divf %156, %157 : vector<8x32xf32>
    %159 = vector.extract_strided_slice %146 {offsets = [0, 64], sizes = [8, 32], strides = [1, 1]} : vector<8x256xf32> to vector<8x32xf32>
    %160 = math.tanh %159 : vector<8x32xf32>
    %161 = vector.extract_strided_slice %146 {offsets = [0, 96], sizes = [8, 32], strides = [1, 1]} : vector<8x256xf32> to vector<8x32xf32>
    %162 = arith.negf %161 : vector<8x32xf32>
    %163 = math.exp %162 : vector<8x32xf32>
    %cst_51 = arith.constant 1.000000e+00 : f32
    %164 = vector.broadcast %cst_51 : f32 to vector<8x32xf32>
    %165 = arith.addf %164, %163 : vector<8x32xf32>
    %166 = arith.divf %164, %165 : vector<8x32xf32>
    %167 = arith.mulf %152, %160 : vector<8x32xf32>
    %168 = arith.mulf %158, %104 : vector<8x32xf32>
    %169 = arith.addf %167, %168 : vector<8x32xf32>
    %170 = math.tanh %169 : vector<8x32xf32>
    %171 = arith.mulf %166, %170 : vector<8x32xf32>
    %172 = vector.extract_strided_slice %146 {offsets = [0, 128], sizes = [8, 32], strides = [1, 1]} : vector<8x256xf32> to vector<8x32xf32>
    %173 = arith.negf %172 : vector<8x32xf32>
    %174 = math.exp %173 : vector<8x32xf32>
    %cst_52 = arith.constant 1.000000e+00 : f32
    %175 = vector.broadcast %cst_52 : f32 to vector<8x32xf32>
    %176 = arith.addf %175, %174 : vector<8x32xf32>
    %177 = arith.divf %175, %176 : vector<8x32xf32>
    %178 = arith.mulf %177, %171 : vector<8x32xf32>
    %cst_53 = arith.constant 1.000000e+00 : f32
    %179 = vector.broadcast %cst_53 : f32 to vector<8x32xf32>
    %180 = arith.subf %179, %177 : vector<8x32xf32>
    %181 = vector.extract_strided_slice %146 {offsets = [0, 160], sizes = [8, 32], strides = [1, 1]} : vector<8x256xf32> to vector<8x32xf32>
    %182 = arith.mulf %180, %181 : vector<8x32xf32>
    %183 = arith.addf %178, %182 : vector<8x32xf32>
    %cst_54 = arith.constant dense<0.000000e+00> : vector<8x128xf32>
    %184 = tpu.matmul %183, %3, %cst_54 {dimension_numbers = #tpu.dot_dimension_numbers<[1], [0], [0], [1], [0, 0, 1, 1], [], []>} : vector<8x32xf32>, vector<32x128xf32>, vector<8x128xf32> -> vector<8x128xf32>
    %185 = vector.broadcast %4 : vector<1x128xf32> to vector<8x128xf32>
    %186 = arith.addf %184, %185 : vector<8x128xf32>
    %cst_55 = arith.constant dense<0xFF800000> : vector<8xf32>
    %187 = vector.multi_reduction <maximumf>, %186, %cst_55 [1] : vector<8x128xf32> to vector<8xf32>
    %188 = vector.shape_cast %187 : vector<8xf32> to vector<8x1xf32>
    %189 = vector.broadcast %188 : vector<8x1xf32> to vector<8x128xf32>
    %190 = arith.cmpf oeq, %186, %189 : vector<8x128xf32>
    %c128_i32_56 = arith.constant 128 : i32
    %191 = vector.broadcast %c128_i32_56 : i32 to vector<8x128xi32>
    %192 = arith.select %190, %6, %191 : vector<8x128xi1>, vector<8x128xi32>
    %cst_57 = arith.constant dense<2147483647> : vector<8xi32>
    %193 = vector.multi_reduction <minsi>, %192, %cst_57 [1] : vector<8x128xi32> to vector<8xi32>
    %194 = vector.shape_cast %193 : vector<8xi32> to vector<8x1xi32>
    %c2 = arith.constant 2 : index
    %c0_58 = arith.constant 0 : index
    %c0_59 = arith.constant 0 : index
    %195 = vector.load %arg7[%c2, %c0_58, %c0_59] : memref<4x8x128xf32, #tpu.memory_space<vmem>>, vector<1x8x128xf32>
    %196 = vector.shape_cast %195 : vector<1x8x128xf32> to vector<8x128xf32>
    %197 = vector.shape_cast %186 : vector<8x128xf32> to vector<1x8x128xf32>
    tpu.vector_store %arg7[%c2, %c0_58, %c0_59], %197 {strides = array<i32>} : memref<4x8x128xf32, #tpu.memory_space<vmem>>, vector<1x8x128xf32>,
    %c2_60 = arith.constant 2 : index
    %c0_61 = arith.constant 0 : index
    %c0_62 = arith.constant 0 : index
    %198 = vector.load %arg8[%c2_60, %c0_61, %c0_62] : memref<4x8x1xi32, #tpu.memory_space<vmem>>, vector<1x8x1xi32>
    %199 = vector.shape_cast %198 : vector<1x8x1xi32> to vector<8x1xi32>
    %200 = vector.shape_cast %194 : vector<8x1xi32> to vector<1x8x1xi32>
    tpu.vector_store %arg8[%c2_60, %c0_61, %c0_62], %200 {strides = array<i32>} : memref<4x8x1xi32, #tpu.memory_space<vmem>>, vector<1x8x1xi32>,
    %c1_i32_63 = arith.constant 1 : i32
    %201 = vector.broadcast %c1_i32_63 : i32 to vector<8x1xi32>
    %202 = arith.addi %194, %201 : vector<8x1xi32>
    %203 = vector.broadcast %202 : vector<8x1xi32> to vector<8x9xi32>
    %204 = arith.cmpi eq, %7, %203 : vector<8x9xi32>
    %205 = arith.extui %204 : vector<8x9xi1> to vector<8x9xi32>
    %206 = arith.sitofp %205 : vector<8x9xi32> to vector<8x9xf32>
    %cst_64 = arith.constant dense<0.000000e+00> : vector<8x100xf32>
    %207 = tpu.matmul %206, %5, %cst_64 {dimension_numbers = #tpu.dot_dimension_numbers<[1], [0], [0], [1], [0, 0, 1, 1], [], []>} : vector<8x9xf32>, vector<9x100xf32>, vector<8x100xf32> -> vector<8x100xf32>
    %cst_65 = arith.constant dense<0.000000e+00> : vector<8x256xf32>
    %208 = tpu.matmul %207, %1, %cst_65 {dimension_numbers = #tpu.dot_dimension_numbers<[1], [0], [0], [1], [0, 0, 1, 1], [], []>} : vector<8x100xf32>, vector<100x256xf32>, vector<8x256xf32> -> vector<8x256xf32>
    %209 = arith.addf %0, %208 : vector<8x256xf32>
    %cst_66 = arith.constant dense<0.000000e+00> : vector<8x256xf32>
    %210 = tpu.matmul %183, %2, %cst_66 {dimension_numbers = #tpu.dot_dimension_numbers<[1], [0], [0], [1], [0, 0, 1, 1], [], []>} : vector<8x32xf32>, vector<32x256xf32>, vector<8x256xf32> -> vector<8x256xf32>
    %211 = arith.addf %209, %210 : vector<8x256xf32>
    %212 = vector.extract_strided_slice %211 {offsets = [0, 0], sizes = [8, 32], strides = [1, 1]} : vector<8x256xf32> to vector<8x32xf32>
    %213 = arith.negf %212 : vector<8x32xf32>
    %214 = math.exp %213 : vector<8x32xf32>
    %cst_67 = arith.constant 1.000000e+00 : f32
    %215 = vector.broadcast %cst_67 : f32 to vector<8x32xf32>
    %216 = arith.addf %215, %214 : vector<8x32xf32>
    %217 = arith.divf %215, %216 : vector<8x32xf32>
    %218 = vector.extract_strided_slice %211 {offsets = [0, 32], sizes = [8, 32], strides = [1, 1]} : vector<8x256xf32> to vector<8x32xf32>
    %219 = arith.negf %218 : vector<8x32xf32>
    %220 = math.exp %219 : vector<8x32xf32>
    %cst_68 = arith.constant 1.000000e+00 : f32
    %221 = vector.broadcast %cst_68 : f32 to vector<8x32xf32>
    %222 = arith.addf %221, %220 : vector<8x32xf32>
    %223 = arith.divf %221, %222 : vector<8x32xf32>
    %224 = vector.extract_strided_slice %211 {offsets = [0, 64], sizes = [8, 32], strides = [1, 1]} : vector<8x256xf32> to vector<8x32xf32>
    %225 = math.tanh %224 : vector<8x32xf32>
    %226 = vector.extract_strided_slice %211 {offsets = [0, 96], sizes = [8, 32], strides = [1, 1]} : vector<8x256xf32> to vector<8x32xf32>
    %227 = arith.negf %226 : vector<8x32xf32>
    %228 = math.exp %227 : vector<8x32xf32>
    %cst_69 = arith.constant 1.000000e+00 : f32
    %229 = vector.broadcast %cst_69 : f32 to vector<8x32xf32>
    %230 = arith.addf %229, %228 : vector<8x32xf32>
    %231 = arith.divf %229, %230 : vector<8x32xf32>
    %232 = arith.mulf %217, %225 : vector<8x32xf32>
    %233 = arith.mulf %223, %169 : vector<8x32xf32>
    %234 = arith.addf %232, %233 : vector<8x32xf32>
    %235 = math.tanh %234 : vector<8x32xf32>
    %236 = arith.mulf %231, %235 : vector<8x32xf32>
    %237 = vector.extract_strided_slice %211 {offsets = [0, 128], sizes = [8, 32], strides = [1, 1]} : vector<8x256xf32> to vector<8x32xf32>
    %238 = arith.negf %237 : vector<8x32xf32>
    %239 = math.exp %238 : vector<8x32xf32>
    %cst_70 = arith.constant 1.000000e+00 : f32
    %240 = vector.broadcast %cst_70 : f32 to vector<8x32xf32>
    %241 = arith.addf %240, %239 : vector<8x32xf32>
    %242 = arith.divf %240, %241 : vector<8x32xf32>
    %243 = arith.mulf %242, %236 : vector<8x32xf32>
    %cst_71 = arith.constant 1.000000e+00 : f32
    %244 = vector.broadcast %cst_71 : f32 to vector<8x32xf32>
    %245 = arith.subf %244, %242 : vector<8x32xf32>
    %246 = vector.extract_strided_slice %211 {offsets = [0, 160], sizes = [8, 32], strides = [1, 1]} : vector<8x256xf32> to vector<8x32xf32>
    %247 = arith.mulf %245, %246 : vector<8x32xf32>
    %248 = arith.addf %243, %247 : vector<8x32xf32>
    %cst_72 = arith.constant dense<0.000000e+00> : vector<8x128xf32>
    %249 = tpu.matmul %248, %3, %cst_72 {dimension_numbers = #tpu.dot_dimension_numbers<[1], [0], [0], [1], [0, 0, 1, 1], [], []>} : vector<8x32xf32>, vector<32x128xf32>, vector<8x128xf32> -> vector<8x128xf32>
    %250 = vector.broadcast %4 : vector<1x128xf32> to vector<8x128xf32>
    %251 = arith.addf %249, %250 : vector<8x128xf32>
    %cst_73 = arith.constant dense<0xFF800000> : vector<8xf32>
    %252 = vector.multi_reduction <maximumf>, %251, %cst_73 [1] : vector<8x128xf32> to vector<8xf32>
    %253 = vector.shape_cast %252 : vector<8xf32> to vector<8x1xf32>
    %254 = vector.broadcast %253 : vector<8x1xf32> to vector<8x128xf32>
    %255 = arith.cmpf oeq, %251, %254 : vector<8x128xf32>
    %c128_i32_74 = arith.constant 128 : i32
    %256 = vector.broadcast %c128_i32_74 : i32 to vector<8x128xi32>
    %257 = arith.select %255, %6, %256 : vector<8x128xi1>, vector<8x128xi32>
    %cst_75 = arith.constant dense<2147483647> : vector<8xi32>
    %258 = vector.multi_reduction <minsi>, %257, %cst_75 [1] : vector<8x128xi32> to vector<8xi32>
    %259 = vector.shape_cast %258 : vector<8xi32> to vector<8x1xi32>
    %c3 = arith.constant 3 : index
    %c0_76 = arith.constant 0 : index
    %c0_77 = arith.constant 0 : index
    %260 = vector.load %arg7[%c3, %c0_76, %c0_77] : memref<4x8x128xf32, #tpu.memory_space<vmem>>, vector<1x8x128xf32>
    %261 = vector.shape_cast %260 : vector<1x8x128xf32> to vector<8x128xf32>
    %262 = vector.shape_cast %251 : vector<8x128xf32> to vector<1x8x128xf32>
    tpu.vector_store %arg7[%c3, %c0_76, %c0_77], %262 {strides = array<i32>} : memref<4x8x128xf32, #tpu.memory_space<vmem>>, vector<1x8x128xf32>,
    %c3_78 = arith.constant 3 : index
    %c0_79 = arith.constant 0 : index
    %c0_80 = arith.constant 0 : index
    %263 = vector.load %arg8[%c3_78, %c0_79, %c0_80] : memref<4x8x1xi32, #tpu.memory_space<vmem>>, vector<1x8x1xi32>
    %264 = vector.shape_cast %263 : vector<1x8x1xi32> to vector<8x1xi32>
    %265 = vector.shape_cast %259 : vector<8x1xi32> to vector<1x8x1xi32>
    tpu.vector_store %arg8[%c3_78, %c0_79, %c0_80], %265 {strides = array<i32>} : memref<4x8x1xi32, #tpu.memory_space<vmem>>, vector<1x8x1xi32>,
    return
  }
  func.func @transform_0(%arg0: i32) -> (i32, i32) {
    %c0_i32 = arith.constant 0 : i32
    %c0_i32_0 = arith.constant 0 : i32
    %c0_i32_1 = arith.constant 0 : i32
    return %c0_i32, %c0_i32_0 : i32, i32
  }
  func.func @transform_1(%arg0: i32) -> (i32, i32) {
    %c0_i32 = arith.constant 0 : i32
    %c0_i32_0 = arith.constant 0 : i32
    %c0_i32_1 = arith.constant 0 : i32
    return %c0_i32, %c0_i32_0 : i32, i32
  }
  func.func @transform_2(%arg0: i32) -> (i32, i32) {
    %c0_i32 = arith.constant 0 : i32
    %c0_i32_0 = arith.constant 0 : i32
    %c0_i32_1 = arith.constant 0 : i32
    return %c0_i32, %c0_i32_0 : i32, i32
  }
  func.func @transform_3(%arg0: i32) -> (i32, i32) {
    %c0_i32 = arith.constant 0 : i32
    %c0_i32_0 = arith.constant 0 : i32
    %c0_i32_1 = arith.constant 0 : i32
    return %c0_i32, %c0_i32_0 : i32, i32
  }
  func.func @transform_4(%arg0: i32) -> (i32, i32) {
    %c0_i32 = arith.constant 0 : i32
    %c0_i32_0 = arith.constant 0 : i32
    %c0_i32_1 = arith.constant 0 : i32
    return %c0_i32, %c0_i32_0 : i32, i32
  }
  func.func @transform_5(%arg0: i32) -> (i32, i32) {
    %c0_i32 = arith.constant 0 : i32
    %c0_i32_0 = arith.constant 0 : i32
    %c0_i32_1 = arith.constant 0 : i32
    return %c0_i32, %c0_i32_0 : i32, i32
  }
  func.func @transform_6(%arg0: i32) -> (i32, i32, i32) {
    %c0_i32 = arith.constant 0 : i32
    %c0_i32_0 = arith.constant 0 : i32
    %c0_i32_1 = arith.constant 0 : i32
    %c0_i32_2 = arith.constant 0 : i32
    return %c0_i32, %c0_i32_0, %c0_i32_1 : i32, i32, i32
  }
  func.func @transform_7(%arg0: i32) -> (i32, i32, i32) {
    %c0_i32 = arith.constant 0 : i32
    %c0_i32_0 = arith.constant 0 : i32
    %c0_i32_1 = arith.constant 0 : i32
    %c0_i32_2 = arith.constant 0 : i32
    return %c0_i32, %c0_i32_0, %c0_i32_1 : i32, i32, i32
  }
}

</mosaic_0001>

<llo_original>
// kernel: decoder_rnn_forward.1
$region0: #{decoder_rnn_forward.1}
  #allocation0 [shape = 'u32[]', space=smem, size = 0x4, offset = 0x4, fixed_abs, tag = 'smem constant byte address 0x4 - core index']
  #allocation1 [shape = 'u32[72,128]{1,0:T(1,128)}', space=vmem, size = 0x9000, scoped, tag = 'internal scratch']
  %s0 = inlined_call_operand.vmem [shape: f32[9,100], index: 0, kind: input, shape index: {}]
  %s1 = inlined_call_operand.vmem [shape: f32[8,256], index: 1, kind: input, shape index: {}]
  %s2 = inlined_call_operand.vmem [shape: f32[100,256], index: 2, kind: input, shape index: {}]
  %s3 = inlined_call_operand.vmem [shape: f32[32,256], index: 3, kind: input, shape index: {}]
  %s4 = inlined_call_operand.vmem [shape: f32[32,128], index: 4, kind: input, shape index: {}]
  %s5 = inlined_call_operand.vmem [shape: f32[1,128], index: 5, kind: input, shape index: {}]
  %s6 = inlined_call_operand.hbm [shape: f32[4,8,128], index: 6, kind: output, shape index: {0}]
  %s7 = inlined_call_operand.vmem [shape: s32[4,8,1], index: 7, kind: output, shape index: {1}]
  %8 = xla_tuple %s6, %s7
  %s9 = sld [smem:[#allocation0]]
  $region42: #{decoder_rnn_forward.1} parent=0
    _
  %s11 = ssub.s32 1, %s9
  %s12 = scalar_select 0, %s11, %s9
  $region1: #{decoder_rnn_forward.1} parent=0
    #allocation2 [shape = 'u8[16384]{0}', space=vmem, size = 0x4000, scoped, tag = 'output window, operand 0, single buffered']
    #allocation3 [shape = 's32[1]{0}', space=sflag, size = 0x4, scoped, tag = 'scoped memory for decoder_rnn_forward.1']
    %13 = vsyncpa [#allocation3], 0
    // Predicated region
    $region2: #{decoder_rnn_forward.1} parent=1 // pred_check
      _
    $region3: #{decoder_rnn_forward.1} parent=1 // pred_check_branch
      %15 = sbr.rel (0) target = $region5
    $region4: #{decoder_rnn_forward.1} parent=1 // pred_region
      _
    $region5: #{decoder_rnn_forward.1} parent=1 // pred_fallthru
      _
    // Predicated region
    $region6: #{decoder_rnn_forward.1} parent=1 // pred_check
      _
    $region7: #{decoder_rnn_forward.1} parent=1 // pred_check_branch
      %17 = sbr.rel (0) target = $region9
    $region8: #{decoder_rnn_forward.1} parent=1 // pred_region
      _
    $region9: #{decoder_rnn_forward.1} parent=1 // pred_fallthru
      _
    // Predicated region
    $region10: #{decoder_rnn_forward.1} parent=1 // pred_check
      _
    $region11: #{decoder_rnn_forward.1} parent=1 // pred_check_branch
      %19 = sbr.rel (0) target = $region13
    $region12: #{decoder_rnn_forward.1} parent=1 // pred_region
      _
    $region13: #{decoder_rnn_forward.1} parent=1 // pred_fallthru
      _
    // Predicated region
    $region14: #{decoder_rnn_forward.1} parent=1 // pred_check
      _
    $region15: #{decoder_rnn_forward.1} parent=1 // pred_check_branch
      %21 = sbr.rel (0) target = $region17
    $region16: #{decoder_rnn_forward.1} parent=1 // pred_region
      _
    $region17: #{decoder_rnn_forward.1} parent=1 // pred_fallthru
      _
    // Predicated region
    $region18: #{decoder_rnn_forward.1} parent=1 // pred_check
      _
    $region19: #{decoder_rnn_forward.1} parent=1 // pred_check_branch
      %23 = sbr.rel (0) target = $region21
    $region20: #{decoder_rnn_forward.1} parent=1 // pred_region
      _
    $region21: #{decoder_rnn_forward.1} parent=1 // pred_fallthru
      _
    // Predicated region
    $region22: #{decoder_rnn_forward.1} parent=1 // pred_check
      _
    $region23: #{decoder_rnn_forward.1} parent=1 // pred_check_branch
      %25 = sbr.rel (0) target = $region25
    $region24: #{decoder_rnn_forward.1} parent=1 // pred_region
      _
    $region25: #{decoder_rnn_forward.1} parent=1 // pred_fallthru
      _
    %v26 = vld [vmem:[%s1] sm:$0xff]
    %v27 = vld [vmem:[%s1 + $0x8] sm:$0xff]
    %v28 = vld [vmem:[%s2] sm:$0xff]
    %v29 = vld [vmem:[%s2 + $0x8] sm:$0xff]
    %v30 = vld [vmem:[%s2 + $0x10] sm:$0xff]
    %v31 = vld [vmem:[%s2 + $0x18] sm:$0xff]
    %v32 = vld [vmem:[%s2 + $0x20] sm:$0xff]
    %v33 = vld [vmem:[%s2 + $0x28] sm:$0xff]
    %v34 = vld [vmem:[%s2 + $0x30] sm:$0xff]
    %v35 = vld [vmem:[%s2 + $0x38] sm:$0xff]
    %v36 = vld [vmem:[%s2 + $0x40] sm:$0xff]
    %v37 = vld [vmem:[%s2 + $0x48] sm:$0xff]
    %v38 = vld [vmem:[%s2 + $0x50] sm:$0xff]
    %v39 = vld [vmem:[%s2 + $0x58] sm:$0xff]
    %v40 = vld [vmem:[%s2 + $0x60] sm:$0xff]
    %v41 = vld [vmem:[%s2 + $0x68] sm:$0xff]
    %v42 = vld [vmem:[%s2 + $0x70] sm:$0xff]
    %v43 = vld [vmem:[%s2 + $0x78] sm:$0xff]
    %v44 = vld [vmem:[%s2 + $0x80] sm:$0xff]
    %v45 = vld [vmem:[%s2 + $0x88] sm:$0xff]
    %v46 = vld [vmem:[%s2 + $0x90] sm:$0xff]
    %v47 = vld [vmem:[%s2 + $0x98] sm:$0xff]
    %v48 = vld [vmem:[%s2 + $0xa0] sm:$0xff]
    %v49 = vld [vmem:[%s2 + $0xa8] sm:$0xff]
    %v50 = vld [vmem:[%s2 + $0xb0] sm:$0xff]
    %v51 = vld [vmem:[%s2 + $0xb8] sm:$0xff]
    %v52 = vld [vmem:[%s2 + $0xc0] sm:$0xf]
    %v53 = vld [vmem:[%s2 + $0xc8] sm:$0xf]
    %v54 = vld [vmem:[%s3] sm:$0xff]
    %v55 = vld [vmem:[%s3 + $0x8] sm:$0xff]
    %v56 = vld [vmem:[%s3 + $0x10] sm:$0xff]
    %v57 = vld [vmem:[%s3 + $0x18] sm:$0xff]
    %v58 = vld [vmem:[%s3 + $0x20] sm:$0xff]
    %v59 = vld [vmem:[%s3 + $0x28] sm:$0xff]
    %v60 = vld [vmem:[%s3 + $0x30] sm:$0xff]
    %v61 = vld [vmem:[%s3 + $0x38] sm:$0xff]
    %v62 = vld [vmem:[%s4] sm:$0xff]
    %v63 = vld [vmem:[%s4 + $0x8] sm:$0xff]
    %v64 = vld [vmem:[%s4 + $0x10] sm:$0xff]
    %v65 = vld [vmem:[%s4 + $0x18] sm:$0xff]
    %v66 = vld [vmem:[%s5] sm:$0x1]
    %v67 = vld [vmem:[%s0] sm:$0xff]
    %v68 = vld [vmem:[%s0 + $0x8] sm:$0x1]
    %v69 = vlaneseq
    %v70 = vand.u32 %v69, 127
    %v71 = vperm.slane %v67, 0
    %vm72 = vcmask 818176
    %v74 = vsel %vm72, %v71, 0
    %vm76 = vcmask 1043456
    %v78 = vsel %vm76, %v52, 0
    %v81 = vsel %vm76, %v53, 0
    %83 = vmatpush.msra.mxu0 0.0
    %84 = vmatpush.msra.mxu0 0.0
    %85 = vmatpush.msra.mxu0 0.0
    %86 = vmatpush.msra.mxu0 %v78
    %87 = vmatpush.msra.mxu0 %v50
    %88 = vmatpush.msra.mxu0 %v48
    %89 = vmatpush.msra.mxu0 %v46
    %90 = vmatpush.msra.mxu0 %v44
    %91 = vmatpush.msra.mxu0 %v42
    %92 = vmatpush.msra.mxu0 %v40
    %93 = vmatpush.msra.mxu0 %v38
    %94 = vmatpush.msra.mxu0 %v36
    %95 = vmatpush.msra.mxu0 %v34
    %96 = vmatpush.msra.mxu0 %v32
    %97 = vmatpush.msra.mxu0 %v30
    %98 = vmatpush.msra.mxu0 %v28
    %99 = vmatmul.f32.gmra.mxu0 %v74
    %v100 = vpop.f32.mrf.mxu0
    %v101 = vadd.f32 0.0, %v100
    %102 = vdwg.mxu0
    %103 = vmatpush.msra.mxu0 0.0
    %104 = vmatpush.msra.mxu0 0.0
    %105 = vmatpush.msra.mxu0 0.0
    %106 = vmatpush.msra.mxu0 %v81
    %107 = vmatpush.msra.mxu0 %v51
    %108 = vmatpush.msra.mxu0 %v49
    %109 = vmatpush.msra.mxu0 %v47
    %110 = vmatpush.msra.mxu0 %v45
    %111 = vmatpush.msra.mxu0 %v43
    %112 = vmatpush.msra.mxu0 %v41
    %113 = vmatpush.msra.mxu0 %v39
    %114 = vmatpush.msra.mxu0 %v37
    %115 = vmatpush.msra.mxu0 %v35
    %116 = vmatpush.msra.mxu0 %v33
    %117 = vmatpush.msra.mxu0 %v31
    %118 = vmatpush.msra.mxu0 %v29
    %119 = vmatmul.f32.gmra.mxu0 %v74
    %v120 = vpop.f32.mrf.mxu0
    %v121 = vadd.f32 0.0, %v120
    %122 = vdwg.mxu0
    %v123 = vadd.f32 %v26, %v101
    %v124 = vadd.f32 %v27, %v121
    %vm125 = vcmask 261120
    %v127 = vsel %vm125, 0.0, 0
    %129 = vmatpush.msra.mxu0 0.0
    %130 = vmatpush.msra.mxu0 0.0
    %131 = vmatpush.msra.mxu0 0.0
    %132 = vmatpush.msra.mxu0 0.0
    %133 = vmatpush.msra.mxu0 0.0
    %134 = vmatpush.msra.mxu0 0.0
    %135 = vmatpush.msra.mxu0 0.0
    %136 = vmatpush.msra.mxu0 0.0
    %137 = vmatpush.msra.mxu0 0.0
    %138 = vmatpush.msra.mxu0 0.0
    %139 = vmatpush.msra.mxu0 0.0
    %140 = vmatpush.msra.mxu0 0.0
    %141 = vmatpush.msra.mxu0 %v60
    %142 = vmatpush.msra.mxu0 %v58
    %143 = vmatpush.msra.mxu0 %v56
    %144 = vmatpush.msra.mxu0 %v54
    %145 = vmatmul.f32.gmra.mxu0 %v127
    %v146 = vpop.f32.mrf.mxu0
    %v147 = vadd.f32 0.0, %v146
    %148 = vdwg.mxu0
    %149 = vmatpush.msra.mxu0 0.0
    %150 = vmatpush.msra.mxu0 0.0
    %151 = vmatpush.msra.mxu0 0.0
    %152 = vmatpush.msra.mxu0 0.0
    %153 = vmatpush.msra.mxu0 0.0
    %154 = vmatpush.msra.mxu0 0.0
    %155 = vmatpush.msra.mxu0 0.0
    %156 = vmatpush.msra.mxu0 0.0
    %157 = vmatpush.msra.mxu0 0.0
    %158 = vmatpush.msra.mxu0 0.0
    %159 = vmatpush.msra.mxu0 0.0
    %160 = vmatpush.msra.mxu0 0.0
    %161 = vmatpush.msra.mxu0 %v61
    %162 = vmatpush.msra.mxu0 %v59
    %163 = vmatpush.msra.mxu0 %v57
    %164 = vmatpush.msra.mxu0 %v55
    %165 = vmatmul.f32.gmra.mxu0 %v127
    %v166 = vpop.f32.mrf.mxu0
    %v167 = vadd.f32 0.0, %v166
    %168 = vdwg.mxu0
    %v169 = vadd.f32 %v123, %v147
    %v170 = vadd.f32 %v124, %v167
    %v171 = vxor.u32 %v169, 2147483648
    %v172 = vmul.f32 %v171, 1.442695
    %v173 = vpow.pop %v172
    %v174 = vadd.f32 %v173, 1.0
    %v175 = vrcp.pop %v174
    %v176 = vmul.f32 %v174, %v175
    %v177 = vsub.f32 1.0, %v176
    %v178 = vmul.f32 %v175, %v177
    %v179 = vadd.f32 %v175, %v178
    %vm180 = vweird.f32 %v174
    %vm181 = vweird.f32 %v175
    %vm182 = vmor %vm180, %vm181
    %v183 = vsel %vm182, %v175, %v179
    %v184 = vand.u32 2147483647, %v174
    %vm185 = vcmp.eq.f32.partialorder %v184, 8.507059e+37
    %v186 = vand.u32 %v174, 2147483648
    %v187 = vor.u32 1.1754944e-38, %v186
    %v188 = vsel %vm185, %v187, %v183
    %v189 = vmul.f32 1.0, %v188
    %v190 = vtanh.pop %v169
    %192 = vrot.lane.b32.xlu0 %v190, 64
    %v193 = vpop.permute.xlu0 %192
    %v195 = vmul.f32 %v189, %v193
    %v196 = vmul.f32 %v189, 0.0
    %198 = vrot.lane.b32.xlu0 %v196, 96
    %v199 = vpop.permute.xlu0 %198
    %v201 = vadd.f32 %v195, %v199
    %v202 = vtanh.pop %v201
    %204 = vrot.lane.b32.xlu0 %v202, 96
    %v205 = vpop.permute.xlu0 %204
    %v207 = vmul.f32 %v189, %v205
    %v208 = vxor.u32 %v170, 2147483648
    %v209 = vmul.f32 %v208, 1.442695
    %v210 = vpow.pop %v209
    %v211 = vadd.f32 %v210, 1.0
    %v212 = vrcp.pop %v211
    %v213 = vmul.f32 %v211, %v212
    %v214 = vsub.f32 1.0, %v213
    %v215 = vmul.f32 %v212, %v214
    %v216 = vadd.f32 %v212, %v215
    %vm217 = vweird.f32 %v211
    %vm218 = vweird.f32 %v212
    %vm219 = vmor %vm217, %vm218
    %v220 = vsel %vm219, %v212, %v216
    %v221 = vand.u32 2147483647, %v211
    %vm222 = vcmp.eq.f32.partialorder %v221, 8.507059e+37
    %v223 = vand.u32 %v211, 2147483648
    %v224 = vor.u32 1.1754944e-38, %v223
    %v225 = vsel %vm222, %v224, %v220
    %v226 = vmul.f32 1.0, %v225
    %228 = vrot.lane.b32.xlu0 %v207, 32
    %v229 = vpop.permute.xlu0 %228
    %v231 = vmul.f32 %v226, %v229
    %v232 = vsub.f32 1.0, %v226
    %234 = vrot.lane.b32.xlu0 %v170, 96
    %v235 = vpop.permute.xlu0 %234
    %v237 = vmul.f32 %v232, %v235
    %v238 = vadd.f32 %v231, %v237
    %v240 = vperm.slane %v66, 0
    %v243 = vsel %vm125, %v238, 0
    %245 = vmatpush.msra.mxu0 0.0
    %246 = vmatpush.msra.mxu0 0.0
    %247 = vmatpush.msra.mxu0 0.0
    %248 = vmatpush.msra.mxu0 0.0
    %249 = vmatpush.msra.mxu0 0.0
    %250 = vmatpush.msra.mxu0 0.0
    %251 = vmatpush.msra.mxu0 0.0
    %252 = vmatpush.msra.mxu0 0.0
    %253 = vmatpush.msra.mxu0 0.0
    %254 = vmatpush.msra.mxu0 0.0
    %255 = vmatpush.msra.mxu0 0.0
    %256 = vmatpush.msra.mxu0 0.0
    %257 = vmatpush.msra.mxu0 %v65
    %258 = vmatpush.msra.mxu0 %v64
    %259 = vmatpush.msra.mxu0 %v63
    %260 = vmatpush.msra.mxu0 %v62
    %261 = vmatmul.f32.gmra.mxu0 %v243
    %v262 = vpop.f32.mrf.mxu0
    %v263 = vadd.f32 %v240, %v262
    %264 = vdwg.mxu0
    %265 = vmax.xlane.f32.xlu0 %v263
    %v266 = vpop.xlane.xlu0 %265
    %vm267 = vcmp.eq.f32.partialorder %v263, %v266
    %v268 = vsel %vm267, %v70, 128
    %v269 = vand.u32 %v268, 65535
    %v270 = vshra.s32 %v268, 16
    %v271 = vcvt.s32.f32 %v269
    %v272 = vcvt.s32.f32 %v270
    %273 = vmin.xlane.f32.xlu0 %v272
    %v274 = vpop.xlane.xlu0 %273
    %vm275 = vcmp.eq.f32.partialorder %v272, %v274
    %v276 = vsel %vm275, %v271, inf
    %277 = vmin.xlane.f32.xlu0 %v276
    %v278 = vpop.xlane.xlu0 %277
    %v279 = vcvt.f32.s32 %v278
    %v280 = vcvt.f32.s32 %v274
    %v281 = vshll.u32 %v280, 16
    %v282 = vadd.s32 %v281, %v279
    %283 = vst [vmem:[#allocation2] sm:$0xff] %v263
    %vm284 = vcmask 7168
    %285 = vst.msk [vmem:[%s7] sm:$0xff] %vm284, %v282
    %v286 = vadd.s32 %v282, 1
    %vm287 = vcmp.eq.s32.totalorder %v70, %v286
    %v288 = vsel %vm287, 1, 0
    %v289 = vcvt.s32.f32 %v288
    %vm290 = vcmask 72704
    %v292 = vsel %vm290, %v289, 0
    %vm294 = vcmask 1040384
    %v296 = vsel %vm294, %v68, 0
    %298 = vmatpush.msra.mxu0 0.0
    %299 = vmatpush.msra.mxu0 0.0
    %300 = vmatpush.msra.mxu0 0.0
    %301 = vmatpush.msra.mxu0 0.0
    %302 = vmatpush.msra.mxu0 0.0
    %303 = vmatpush.msra.mxu0 0.0
    %304 = vmatpush.msra.mxu0 0.0
    %305 = vmatpush.msra.mxu0 0.0
    %306 = vmatpush.msra.mxu0 0.0
    %307 = vmatpush.msra.mxu0 0.0
    %308 = vmatpush.msra.mxu0 0.0
    %309 = vmatpush.msra.mxu0 0.0
    %310 = vmatpush.msra.mxu0 0.0
    %311 = vmatpush.msra.mxu0 0.0
    %312 = vmatpush.msra.mxu0 %v296
    %313 = vmatpush.msra.mxu0 %v67
    %314 = vmatmul.f32.gmra.mxu0 %v292
    %v315 = vpop.f32.mrf.mxu0
    %v316 = vadd.f32 0.0, %v315
    %317 = vdwg.mxu0
    %v319 = vsel %vm72, %v316, 0
    %321 = vmatpush.msra.mxu0 0.0
    %322 = vmatpush.msra.mxu0 0.0
    %323 = vmatpush.msra.mxu0 0.0
    %324 = vmatpush.msra.mxu0 %v78
    %325 = vmatpush.msra.mxu0 %v50
    %326 = vmatpush.msra.mxu0 %v48
    %327 = vmatpush.msra.mxu0 %v46
    %328 = vmatpush.msra.mxu0 %v44
    %329 = vmatpush.msra.mxu0 %v42
    %330 = vmatpush.msra.mxu0 %v40
    %331 = vmatpush.msra.mxu0 %v38
    %332 = vmatpush.msra.mxu0 %v36
    %333 = vmatpush.msra.mxu0 %v34
    %334 = vmatpush.msra.mxu0 %v32
    %335 = vmatpush.msra.mxu0 %v30
    %336 = vmatpush.msra.mxu0 %v28
    %337 = vmatmul.f32.gmra.mxu0 %v319
    %v338 = vpop.f32.mrf.mxu0
    %v339 = vadd.f32 0.0, %v338
    %340 = vdwg.mxu0
    %341 = vmatpush.msra.mxu0 0.0
    %342 = vmatpush.msra.mxu0 0.0
    %343 = vmatpush.msra.mxu0 0.0
    %344 = vmatpush.msra.mxu0 %v81
    %345 = vmatpush.msra.mxu0 %v51
    %346 = vmatpush.msra.mxu0 %v49
    %347 = vmatpush.msra.mxu0 %v47
    %348 = vmatpush.msra.mxu0 %v45
    %349 = vmatpush.msra.mxu0 %v43
    %350 = vmatpush.msra.mxu0 %v41
    %351 = vmatpush.msra.mxu0 %v39
    %352 = vmatpush.msra.mxu0 %v37
    %353 = vmatpush.msra.mxu0 %v35
    %354 = vmatpush.msra.mxu0 %v33
    %355 = vmatpush.msra.mxu0 %v31
    %356 = vmatpush.msra.mxu0 %v29
    %357 = vmatmul.f32.gmra.mxu0 %v319
    %v358 = vpop.f32.mrf.mxu0
    %v359 = vadd.f32 0.0, %v358
    %360 = vdwg.mxu0
    %v361 = vadd.f32 %v26, %v339
    %v362 = vadd.f32 %v27, %v359
    %363 = vmatpush.msra.mxu0 0.0
    %364 = vmatpush.msra.mxu0 0.0
    %365 = vmatpush.msra.mxu0 0.0
    %366 = vmatpush.msra.mxu0 0.0
    %367 = vmatpush.msra.mxu0 0.0
    %368 = vmatpush.msra.mxu0 0.0
    %369 = vmatpush.msra.mxu0 0.0
    %370 = vmatpush.msra.mxu0 0.0
    %371 = vmatpush.msra.mxu0 0.0
    %372 = vmatpush.msra.mxu0 0.0
    %373 = vmatpush.msra.mxu0 0.0
    %374 = vmatpush.msra.mxu0 0.0
    %375 = vmatpush.msra.mxu0 %v60
    %376 = vmatpush.msra.mxu0 %v58
    %377 = vmatpush.msra.mxu0 %v56
    %378 = vmatpush.msra.mxu0 %v54
    %379 = vmatmul.f32.gmra.mxu0 %v243
    %v380 = vpop.f32.mrf.mxu0
    %v381 = vadd.f32 0.0, %v380
    %382 = vdwg.mxu0
    %383 = vmatpush.msra.mxu0 0.0
    %384 = vmatpush.msra.mxu0 0.0
    %385 = vmatpush.msra.mxu0 0.0
    %386 = vmatpush.msra.mxu0 0.0
    %387 = vmatpush.msra.mxu0 0.0
    %388 = vmatpush.msra.mxu0 0.0
    %389 = vmatpush.msra.mxu0 0.0
    %390 = vmatpush.msra.mxu0 0.0
    %391 = vmatpush.msra.mxu0 0.0
    %392 = vmatpush.msra.mxu0 0.0
    %393 = vmatpush.msra.mxu0 0.0
    %394 = vmatpush.msra.mxu0 0.0
    %395 = vmatpush.msra.mxu0 %v61
    %396 = vmatpush.msra.mxu0 %v59
    %397 = vmatpush.msra.mxu0 %v57
    %398 = vmatpush.msra.mxu0 %v55
    %399 = vmatmul.f32.gmra.mxu0 %v243
    %v400 = vpop.f32.mrf.mxu0
    %v401 = vadd.f32 0.0, %v400
    %402 = vdwg.mxu0
    %v403 = vadd.f32 %v361, %v381
    %v404 = vadd.f32 %v362, %v401
    %v405 = vxor.u32 %v403, 2147483648
    %v406 = vmul.f32 %v405, 1.442695
    %v407 = vpow.pop %v406
    %v408 = vadd.f32 %v407, 1.0
    %v409 = vrcp.pop %v408
    %v410 = vmul.f32 %v408, %v409
    %v411 = vsub.f32 1.0, %v410
    %v412 = vmul.f32 %v409, %v411
    %v413 = vadd.f32 %v409, %v412
    %vm414 = vweird.f32 %v408
    %vm415 = vweird.f32 %v409
    %vm416 = vmor %vm414, %vm415
    %v417 = vsel %vm416, %v409, %v413
    %v418 = vand.u32 2147483647, %v408
    %vm419 = vcmp.eq.f32.partialorder %v418, 8.507059e+37
    %v420 = vand.u32 %v408, 2147483648
    %v421 = vor.u32 1.1754944e-38, %v420
    %v422 = vsel %vm419, %v421, %v417
    %v423 = vmul.f32 1.0, %v422
    %v424 = vtanh.pop %v403
    %426 = vrot.lane.b32.xlu0 %v424, 64
    %v427 = vpop.permute.xlu0 %426
    %v429 = vmul.f32 %v423, %v427
    %431 = vrot.lane.b32.xlu0 %v201, 32
    %v432 = vpop.permute.xlu0 %431
    %v434 = vmul.f32 %v423, %v432
    %436 = vrot.lane.b32.xlu0 %v434, 96
    %v437 = vpop.permute.xlu0 %436
    %v439 = vadd.f32 %v429, %v437
    %v440 = vtanh.pop %v439
    %442 = vrot.lane.b32.xlu0 %v440, 96
    %v443 = vpop.permute.xlu0 %442
    %v445 = vmul.f32 %v423, %v443
    %v446 = vxor.u32 %v404, 2147483648
    %v447 = vmul.f32 %v446, 1.442695
    %v448 = vpow.pop %v447
    %v449 = vadd.f32 %v448, 1.0
    %v450 = vrcp.pop %v449
    %v451 = vmul.f32 %v449, %v450
    %v452 = vsub.f32 1.0, %v451
    %v453 = vmul.f32 %v450, %v452
    %v454 = vadd.f32 %v450, %v453
    %vm455 = vweird.f32 %v449
    %vm456 = vweird.f32 %v450
    %vm457 = vmor %vm455, %vm456
    %v458 = vsel %vm457, %v450, %v454
    %v459 = vand.u32 2147483647, %v449
    %vm460 = vcmp.eq.f32.partialorder %v459, 8.507059e+37
    %v461 = vand.u32 %v449, 2147483648
    %v462 = vor.u32 1.1754944e-38, %v461
    %v463 = vsel %vm460, %v462, %v458
    %v464 = vmul.f32 1.0, %v463
    %466 = vrot.lane.b32.xlu0 %v445, 32
    %v467 = vpop.permute.xlu0 %466
    %v469 = vmul.f32 %v464, %v467
    %v470 = vsub.f32 1.0, %v464
    %472 = vrot.lane.b32.xlu0 %v404, 96
    %v473 = vpop.permute.xlu0 %472
    %v475 = vmul.f32 %v470, %v473
    %v476 = vadd.f32 %v469, %v475
    %v478 = vsel %vm125, %v476, 0
    %480 = vmatpush.msra.mxu0 0.0
    %481 = vmatpush.msra.mxu0 0.0
    %482 = vmatpush.msra.mxu0 0.0
    %483 = vmatpush.msra.mxu0 0.0
    %484 = vmatpush.msra.mxu0 0.0
    %485 = vmatpush.msra.mxu0 0.0
    %486 = vmatpush.msra.mxu0 0.0
    %487 = vmatpush.msra.mxu0 0.0
    %488 = vmatpush.msra.mxu0 0.0
    %489 = vmatpush.msra.mxu0 0.0
    %490 = vmatpush.msra.mxu0 0.0
    %491 = vmatpush.msra.mxu0 0.0
    %492 = vmatpush.msra.mxu0 %v65
    %493 = vmatpush.msra.mxu0 %v64
    %494 = vmatpush.msra.mxu0 %v63
    %495 = vmatpush.msra.mxu0 %v62
    %496 = vmatmul.f32.gmra.mxu0 %v478
    %v497 = vpop.f32.mrf.mxu0
    %v498 = vadd.f32 %v240, %v497
    %499 = vdwg.mxu0
    %500 = vmax.xlane.f32.xlu0 %v498
    %v501 = vpop.xlane.xlu0 %500
    %vm502 = vcmp.eq.f32.partialorder %v498, %v501
    %v503 = vsel %vm502, %v70, 128
    %v504 = vand.u32 %v503, 65535
    %v505 = vshra.s32 %v503, 16
    %v506 = vcvt.s32.f32 %v504
    %v507 = vcvt.s32.f32 %v505
    %508 = vmin.xlane.f32.xlu0 %v507
    %v509 = vpop.xlane.xlu0 %508
    %vm510 = vcmp.eq.f32.partialorder %v507, %v509
    %v511 = vsel %vm510, %v506, inf
    %512 = vmin.xlane.f32.xlu0 %v511
    %v513 = vpop.xlane.xlu0 %512
    %v514 = vcvt.f32.s32 %v513
    %v515 = vcvt.f32.s32 %v509
    %v516 = vshll.u32 %v515, 16
    %v517 = vadd.s32 %v516, %v514
    %s518 = scalar_lea.vmem [#allocation2], 8
    %519 = vst [vmem:[%s518] sm:$0xff] %v498
    %s520 = scalar_lea.vmem %s7, 8
    %521 = vst.msk [vmem:[%s520] sm:$0xff] %vm284, %v517
    %v522 = vadd.s32 %v517, 1
    %vm523 = vcmp.eq.s32.totalorder %v70, %v522
    %v524 = vsel %vm523, 1, 0
    %v525 = vcvt.s32.f32 %v524
    %v527 = vsel %vm290, %v525, 0
    %529 = vmatpush.msra.mxu0 0.0
    %530 = vmatpush.msra.mxu0 0.0
    %531 = vmatpush.msra.mxu0 0.0
    %532 = vmatpush.msra.mxu0 0.0
    %533 = vmatpush.msra.mxu0 0.0
    %534 = vmatpush.msra.mxu0 0.0
    %535 = vmatpush.msra.mxu0 0.0
    %536 = vmatpush.msra.mxu0 0.0
    %537 = vmatpush.msra.mxu0 0.0
    %538 = vmatpush.msra.mxu0 0.0
    %539 = vmatpush.msra.mxu0 0.0
    %540 = vmatpush.msra.mxu0 0.0
    %541 = vmatpush.msra.mxu0 0.0
    %542 = vmatpush.msra.mxu0 0.0
    %543 = vmatpush.msra.mxu0 %v296
    %544 = vmatpush.msra.mxu0 %v67
    %545 = vmatmul.f32.gmra.mxu0 %v527
    %v546 = vpop.f32.mrf.mxu0
    %v547 = vadd.f32 0.0, %v546
    %548 = vdwg.mxu0
    %v550 = vsel %vm72, %v547, 0
    %552 = vmatpush.msra.mxu0 0.0
    %553 = vmatpush.msra.mxu0 0.0
    %554 = vmatpush.msra.mxu0 0.0
    %555 = vmatpush.msra.mxu0 %v78
    %556 = vmatpush.msra.mxu0 %v50
    %557 = vmatpush.msra.mxu0 %v48
    %558 = vmatpush.msra.mxu0 %v46
    %559 = vmatpush.msra.mxu0 %v44
    %560 = vmatpush.msra.mxu0 %v42
    %561 = vmatpush.msra.mxu0 %v40
    %562 = vmatpush.msra.mxu0 %v38
    %563 = vmatpush.msra.mxu0 %v36
    %564 = vmatpush.msra.mxu0 %v34
    %565 = vmatpush.msra.mxu0 %v32
    %566 = vmatpush.msra.mxu0 %v30
    %567 = vmatpush.msra.mxu0 %v28
    %568 = vmatmul.f32.gmra.mxu0 %v550
    %v569 = vpop.f32.mrf.mxu0
    %v570 = vadd.f32 0.0, %v569
    %571 = vdwg.mxu0
    %572 = vmatpush.msra.mxu0 0.0
    %573 = vmatpush.msra.mxu0 0.0
    %574 = vmatpush.msra.mxu0 0.0
    %575 = vmatpush.msra.mxu0 %v81
    %576 = vmatpush.msra.mxu0 %v51
    %577 = vmatpush.msra.mxu0 %v49
    %578 = vmatpush.msra.mxu0 %v47
    %579 = vmatpush.msra.mxu0 %v45
    %580 = vmatpush.msra.mxu0 %v43
    %581 = vmatpush.msra.mxu0 %v41
    %582 = vmatpush.msra.mxu0 %v39
    %583 = vmatpush.msra.mxu0 %v37
    %584 = vmatpush.msra.mxu0 %v35
    %585 = vmatpush.msra.mxu0 %v33
    %586 = vmatpush.msra.mxu0 %v31
    %587 = vmatpush.msra.mxu0 %v29
    %588 = vmatmul.f32.gmra.mxu0 %v550
    %v589 = vpop.f32.mrf.mxu0
    %v590 = vadd.f32 0.0, %v589
    %591 = vdwg.mxu0
    %v592 = vadd.f32 %v26, %v570
    %v593 = vadd.f32 %v27, %v590
    %594 = vmatpush.msra.mxu0 0.0
    %595 = vmatpush.msra.mxu0 0.0
    %596 = vmatpush.msra.mxu0 0.0
    %597 = vmatpush.msra.mxu0 0.0
    %598 = vmatpush.msra.mxu0 0.0
    %599 = vmatpush.msra.mxu0 0.0
    %600 = vmatpush.msra.mxu0 0.0
    %601 = vmatpush.msra.mxu0 0.0
    %602 = vmatpush.msra.mxu0 0.0
    %603 = vmatpush.msra.mxu0 0.0
    %604 = vmatpush.msra.mxu0 0.0
    %605 = vmatpush.msra.mxu0 0.0
    %606 = vmatpush.msra.mxu0 %v60
    %607 = vmatpush.msra.mxu0 %v58
    %608 = vmatpush.msra.mxu0 %v56
    %609 = vmatpush.msra.mxu0 %v54
    %610 = vmatmul.f32.gmra.mxu0 %v478
    %v611 = vpop.f32.mrf.mxu0
    %v612 = vadd.f32 0.0, %v611
    %613 = vdwg.mxu0
    %614 = vmatpush.msra.mxu0 0.0
    %615 = vmatpush.msra.mxu0 0.0
    %616 = vmatpush.msra.mxu0 0.0
    %617 = vmatpush.msra.mxu0 0.0
    %618 = vmatpush.msra.mxu0 0.0
    %619 = vmatpush.msra.mxu0 0.0
    %620 = vmatpush.msra.mxu0 0.0
    %621 = vmatpush.msra.mxu0 0.0
    %622 = vmatpush.msra.mxu0 0.0
    %623 = vmatpush.msra.mxu0 0.0
    %624 = vmatpush.msra.mxu0 0.0
    %625 = vmatpush.msra.mxu0 0.0
    %626 = vmatpush.msra.mxu0 %v61
    %627 = vmatpush.msra.mxu0 %v59
    %628 = vmatpush.msra.mxu0 %v57
    %629 = vmatpush.msra.mxu0 %v55
    %630 = vmatmul.f32.gmra.mxu0 %v478
    %v631 = vpop.f32.mrf.mxu0
    %v632 = vadd.f32 0.0, %v631
    %633 = vdwg.mxu0
    %v634 = vadd.f32 %v592, %v612
    %v635 = vadd.f32 %v593, %v632
    %v636 = vxor.u32 %v634, 2147483648
    %v637 = vmul.f32 %v636, 1.442695
    %v638 = vpow.pop %v637
    %v639 = vadd.f32 %v638, 1.0
    %v640 = vrcp.pop %v639
    %v641 = vmul.f32 %v639, %v640
    %v642 = vsub.f32 1.0, %v641
    %v643 = vmul.f32 %v640, %v642
    %v644 = vadd.f32 %v640, %v643
    %vm645 = vweird.f32 %v639
    %vm646 = vweird.f32 %v640
    %vm647 = vmor %vm645, %vm646
    %v648 = vsel %vm647, %v640, %v644
    %v649 = vand.u32 2147483647, %v639
    %vm650 = vcmp.eq.f32.partialorder %v649, 8.507059e+37
    %v651 = vand.u32 %v639, 2147483648
    %v652 = vor.u32 1.1754944e-38, %v651
    %v653 = vsel %vm650, %v652, %v648
    %v654 = vmul.f32 1.0, %v653
    %v655 = vtanh.pop %v634
    %657 = vrot.lane.b32.xlu0 %v655, 64
    %v658 = vpop.permute.xlu0 %657
    %v660 = vmul.f32 %v654, %v658
    %662 = vrot.lane.b32.xlu0 %v439, 32
    %v663 = vpop.permute.xlu0 %662
    %v665 = vmul.f32 %v654, %v663
    %667 = vrot.lane.b32.xlu0 %v665, 96
    %v668 = vpop.permute.xlu0 %667
    %v670 = vadd.f32 %v660, %v668
    %v671 = vtanh.pop %v670
    %673 = vrot.lane.b32.xlu0 %v671, 96
    %v674 = vpop.permute.xlu0 %673
    %v676 = vmul.f32 %v654, %v674
    %v677 = vxor.u32 %v635, 2147483648
    %v678 = vmul.f32 %v677, 1.442695
    %v679 = vpow.pop %v678
    %v680 = vadd.f32 %v679, 1.0
    %v681 = vrcp.pop %v680
    %v682 = vmul.f32 %v680, %v681
    %v683 = vsub.f32 1.0, %v682
    %v684 = vmul.f32 %v681, %v683
    %v685 = vadd.f32 %v681, %v684
    %vm686 = vweird.f32 %v680
    %vm687 = vweird.f32 %v681
    %vm688 = vmor %vm686, %vm687
    %v689 = vsel %vm688, %v681, %v685
    %v690 = vand.u32 2147483647, %v680
    %vm691 = vcmp.eq.f32.partialorder %v690, 8.507059e+37
    %v692 = vand.u32 %v680, 2147483648
    %v693 = vor.u32 1.1754944e-38, %v692
    %v694 = vsel %vm691, %v693, %v689
    %v695 = vmul.f32 1.0, %v694
    %697 = vrot.lane.b32.xlu0 %v676, 32
    %v698 = vpop.permute.xlu0 %697
    %v700 = vmul.f32 %v695, %v698
    %v701 = vsub.f32 1.0, %v695
    %703 = vrot.lane.b32.xlu0 %v635, 96
    %v704 = vpop.permute.xlu0 %703
    %v706 = vmul.f32 %v701, %v704
    %v707 = vadd.f32 %v700, %v706
    %v709 = vsel %vm125, %v707, 0
    %711 = vmatpush.msra.mxu0 0.0
    %712 = vmatpush.msra.mxu0 0.0
    %713 = vmatpush.msra.mxu0 0.0
    %714 = vmatpush.msra.mxu0 0.0
    %715 = vmatpush.msra.mxu0 0.0
    %716 = vmatpush.msra.mxu0 0.0
    %717 = vmatpush.msra.mxu0 0.0
    %718 = vmatpush.msra.mxu0 0.0
    %719 = vmatpush.msra.mxu0 0.0
    %720 = vmatpush.msra.mxu0 0.0
    %721 = vmatpush.msra.mxu0 0.0
    %722 = vmatpush.msra.mxu0 0.0
    %723 = vmatpush.msra.mxu0 %v65
    %724 = vmatpush.msra.mxu0 %v64
    %725 = vmatpush.msra.mxu0 %v63
    %726 = vmatpush.msra.mxu0 %v62
    %727 = vmatmul.f32.gmra.mxu0 %v709
    %v728 = vpop.f32.mrf.mxu0
    %v729 = vadd.f32 %v240, %v728
    %730 = vdwg.mxu0
    %731 = vmax.xlane.f32.xlu0 %v729
    %v732 = vpop.xlane.xlu0 %731
    %vm733 = vcmp.eq.f32.partialorder %v729, %v732
    %v734 = vsel %vm733, %v70, 128
    %v735 = vand.u32 %v734, 65535
    %v736 = vshra.s32 %v734, 16
    %v737 = vcvt.s32.f32 %v735
    %v738 = vcvt.s32.f32 %v736
    %739 = vmin.xlane.f32.xlu0 %v738
    %v740 = vpop.xlane.xlu0 %739
    %vm741 = vcmp.eq.f32.partialorder %v738, %v740
    %v742 = vsel %vm741, %v737, inf
    %743 = vmin.xlane.f32.xlu0 %v742
    %v744 = vpop.xlane.xlu0 %743
    %v745 = vcvt.f32.s32 %v744
    %v746 = vcvt.f32.s32 %v740
    %v747 = vshll.u32 %v746, 16
    %v748 = vadd.s32 %v747, %v745
    %s749 = scalar_lea.vmem [#allocation2], 16
    %750 = vst [vmem:[%s749] sm:$0xff] %v729
    %s751 = scalar_lea.vmem %s7, 16
    %752 = vst.msk [vmem:[%s751] sm:$0xff] %vm284, %v748
    %v753 = vadd.s32 %v748, 1
    %vm754 = vcmp.eq.s32.totalorder %v70, %v753
    %v755 = vsel %vm754, 1, 0
    %v756 = vcvt.s32.f32 %v755
    %v758 = vsel %vm290, %v756, 0
    %760 = vmatpush.msra.mxu0 0.0
    %761 = vmatpush.msra.mxu0 0.0
    %762 = vmatpush.msra.mxu0 0.0
    %763 = vmatpush.msra.mxu0 0.0
    %764 = vmatpush.msra.mxu0 0.0
    %765 = vmatpush.msra.mxu0 0.0
    %766 = vmatpush.msra.mxu0 0.0
    %767 = vmatpush.msra.mxu0 0.0
    %768 = vmatpush.msra.mxu0 0.0
    %769 = vmatpush.msra.mxu0 0.0
    %770 = vmatpush.msra.mxu0 0.0
    %771 = vmatpush.msra.mxu0 0.0
    %772 = vmatpush.msra.mxu0 0.0
    %773 = vmatpush.msra.mxu0 0.0
    %774 = vmatpush.msra.mxu0 %v296
    %775 = vmatpush.msra.mxu0 %v67
    %776 = vmatmul.f32.gmra.mxu0 %v758
    %v777 = vpop.f32.mrf.mxu0
    %v778 = vadd.f32 0.0, %v777
    %779 = vdwg.mxu0
    %v781 = vsel %vm72, %v778, 0
    %783 = vmatpush.msra.mxu0 0.0
    %784 = vmatpush.msra.mxu0 0.0
    %785 = vmatpush.msra.mxu0 0.0
    %786 = vmatpush.msra.mxu0 %v78
    %787 = vmatpush.msra.mxu0 %v50
    %788 = vmatpush.msra.mxu0 %v48
    %789 = vmatpush.msra.mxu0 %v46
    %790 = vmatpush.msra.mxu0 %v44
    %791 = vmatpush.msra.mxu0 %v42
    %792 = vmatpush.msra.mxu0 %v40
    %793 = vmatpush.msra.mxu0 %v38
    %794 = vmatpush.msra.mxu0 %v36
    %795 = vmatpush.msra.mxu0 %v34
    %796 = vmatpush.msra.mxu0 %v32
    %797 = vmatpush.msra.mxu0 %v30
    %798 = vmatpush.msra.mxu0 %v28
    %799 = vmatmul.f32.gmra.mxu0 %v781
    %v800 = vpop.f32.mrf.mxu0
    %v801 = vadd.f32 0.0, %v800
    %802 = vdwg.mxu0
    %803 = vmatpush.msra.mxu0 0.0
    %804 = vmatpush.msra.mxu0 0.0
    %805 = vmatpush.msra.mxu0 0.0
    %806 = vmatpush.msra.mxu0 %v81
    %807 = vmatpush.msra.mxu0 %v51
    %808 = vmatpush.msra.mxu0 %v49
    %809 = vmatpush.msra.mxu0 %v47
    %810 = vmatpush.msra.mxu0 %v45
    %811 = vmatpush.msra.mxu0 %v43
    %812 = vmatpush.msra.mxu0 %v41
    %813 = vmatpush.msra.mxu0 %v39
    %814 = vmatpush.msra.mxu0 %v37
    %815 = vmatpush.msra.mxu0 %v35
    %816 = vmatpush.msra.mxu0 %v33
    %817 = vmatpush.msra.mxu0 %v31
    %818 = vmatpush.msra.mxu0 %v29
    %819 = vmatmul.f32.gmra.mxu0 %v781
    %v820 = vpop.f32.mrf.mxu0
    %v821 = vadd.f32 0.0, %v820
    %822 = vdwg.mxu0
    %v823 = vadd.f32 %v26, %v801
    %v824 = vadd.f32 %v27, %v821
    %825 = vmatpush.msra.mxu0 0.0
    %826 = vmatpush.msra.mxu0 0.0
    %827 = vmatpush.msra.mxu0 0.0
    %828 = vmatpush.msra.mxu0 0.0
    %829 = vmatpush.msra.mxu0 0.0
    %830 = vmatpush.msra.mxu0 0.0
    %831 = vmatpush.msra.mxu0 0.0
    %832 = vmatpush.msra.mxu0 0.0
    %833 = vmatpush.msra.mxu0 0.0
    %834 = vmatpush.msra.mxu0 0.0
    %835 = vmatpush.msra.mxu0 0.0
    %836 = vmatpush.msra.mxu0 0.0
    %837 = vmatpush.msra.mxu0 %v60
    %838 = vmatpush.msra.mxu0 %v58
    %839 = vmatpush.msra.mxu0 %v56
    %840 = vmatpush.msra.mxu0 %v54
    %841 = vmatmul.f32.gmra.mxu0 %v709
    %v842 = vpop.f32.mrf.mxu0
    %v843 = vadd.f32 0.0, %v842
    %844 = vdwg.mxu0
    %845 = vmatpush.msra.mxu0 0.0
    %846 = vmatpush.msra.mxu0 0.0
    %847 = vmatpush.msra.mxu0 0.0
    %848 = vmatpush.msra.mxu0 0.0
    %849 = vmatpush.msra.mxu0 0.0
    %850 = vmatpush.msra.mxu0 0.0
    %851 = vmatpush.msra.mxu0 0.0
    %852 = vmatpush.msra.mxu0 0.0
    %853 = vmatpush.msra.mxu0 0.0
    %854 = vmatpush.msra.mxu0 0.0
    %855 = vmatpush.msra.mxu0 0.0
    %856 = vmatpush.msra.mxu0 0.0
    %857 = vmatpush.msra.mxu0 %v61
    %858 = vmatpush.msra.mxu0 %v59
    %859 = vmatpush.msra.mxu0 %v57
    %860 = vmatpush.msra.mxu0 %v55
    %861 = vmatmul.f32.gmra.mxu0 %v709
    %v862 = vpop.f32.mrf.mxu0
    %v863 = vadd.f32 0.0, %v862
    %864 = vdwg.mxu0
    %v865 = vadd.f32 %v823, %v843
    %v866 = vadd.f32 %v824, %v863
    %v867 = vxor.u32 %v865, 2147483648
    %v868 = vmul.f32 %v867, 1.442695
    %v869 = vpow.pop %v868
    %v870 = vadd.f32 %v869, 1.0
    %v871 = vrcp.pop %v870
    %v872 = vmul.f32 %v870, %v871
    %v873 = vsub.f32 1.0, %v872
    %v874 = vmul.f32 %v871, %v873
    %v875 = vadd.f32 %v871, %v874
    %vm876 = vweird.f32 %v870
    %vm877 = vweird.f32 %v871
    %vm878 = vmor %vm876, %vm877
    %v879 = vsel %vm878, %v871, %v875
    %v880 = vand.u32 2147483647, %v870
    %vm881 = vcmp.eq.f32.partialorder %v880, 8.507059e+37
    %v882 = vand.u32 %v870, 2147483648
    %v883 = vor.u32 1.1754944e-38, %v882
    %v884 = vsel %vm881, %v883, %v879
    %v885 = vmul.f32 1.0, %v884
    %v886 = vtanh.pop %v865
    %888 = vrot.lane.b32.xlu0 %v886, 64
    %v889 = vpop.permute.xlu0 %888
    %v891 = vmul.f32 %v885, %v889
    %893 = vrot.lane.b32.xlu0 %v670, 32
    %v894 = vpop.permute.xlu0 %893
    %v896 = vmul.f32 %v885, %v894
    %898 = vrot.lane.b32.xlu0 %v896, 96
    %v899 = vpop.permute.xlu0 %898
    %v901 = vadd.f32 %v891, %v899
    %v902 = vtanh.pop %v901
    %904 = vrot.lane.b32.xlu0 %v902, 96
    %v905 = vpop.permute.xlu0 %904
    %v907 = vmul.f32 %v885, %v905
    %v908 = vxor.u32 %v866, 2147483648
    %v909 = vmul.f32 %v908, 1.442695
    %v910 = vpow.pop %v909
    %v911 = vadd.f32 %v910, 1.0
    %v912 = vrcp.pop %v911
    %v913 = vmul.f32 %v911, %v912
    %v914 = vsub.f32 1.0, %v913
    %v915 = vmul.f32 %v912, %v914
    %v916 = vadd.f32 %v912, %v915
    %vm917 = vweird.f32 %v911
    %vm918 = vweird.f32 %v912
    %vm919 = vmor %vm917, %vm918
    %v920 = vsel %vm919, %v912, %v916
    %v921 = vand.u32 2147483647, %v911
    %vm922 = vcmp.eq.f32.partialorder %v921, 8.507059e+37
    %v923 = vand.u32 %v911, 2147483648
    %v924 = vor.u32 1.1754944e-38, %v923
    %v925 = vsel %vm922, %v924, %v920
    %v926 = vmul.f32 1.0, %v925
    %928 = vrot.lane.b32.xlu0 %v907, 32
    %v929 = vpop.permute.xlu0 %928
    %v931 = vmul.f32 %v926, %v929
    %v932 = vsub.f32 1.0, %v926
    %934 = vrot.lane.b32.xlu0 %v866, 96
    %v935 = vpop.permute.xlu0 %934
    %v937 = vmul.f32 %v932, %v935
    %v938 = vadd.f32 %v931, %v937
    %v940 = vsel %vm125, %v938, 0
    %942 = vmatpush.msra.mxu0 0.0
    %943 = vmatpush.msra.mxu0 0.0
    %944 = vmatpush.msra.mxu0 0.0
    %945 = vmatpush.msra.mxu0 0.0
    %946 = vmatpush.msra.mxu0 0.0
    %947 = vmatpush.msra.mxu0 0.0
    %948 = vmatpush.msra.mxu0 0.0
    %949 = vmatpush.msra.mxu0 0.0
    %950 = vmatpush.msra.mxu0 0.0
    %951 = vmatpush.msra.mxu0 0.0
    %952 = vmatpush.msra.mxu0 0.0
    %953 = vmatpush.msra.mxu0 0.0
    %954 = vmatpush.msra.mxu0 %v65
    %955 = vmatpush.msra.mxu0 %v64
    %956 = vmatpush.msra.mxu0 %v63
    %957 = vmatpush.msra.mxu0 %v62
    %958 = vmatmul.f32.gmra.mxu0 %v940
    %v959 = vpop.f32.mrf.mxu0
    %v960 = vadd.f32 %v240, %v959
    %961 = vdwg.mxu0
    %962 = vmax.xlane.f32.xlu0 %v960
    %v963 = vpop.xlane.xlu0 %962
    %vm964 = vcmp.eq.f32.partialorder %v960, %v963
    %v965 = vsel %vm964, %v70, 128
    %v966 = vand.u32 %v965, 65535
    %v967 = vshra.s32 %v965, 16
    %v968 = vcvt.s32.f32 %v966
    %v969 = vcvt.s32.f32 %v967
    %970 = vmin.xlane.f32.xlu0 %v969
    %v971 = vpop.xlane.xlu0 %970
    %vm972 = vcmp.eq.f32.partialorder %v969, %v971
    %v973 = vsel %vm972, %v968, inf
    %974 = vmin.xlane.f32.xlu0 %v973
    %v975 = vpop.xlane.xlu0 %974
    %v976 = vcvt.f32.s32 %v975
    %v977 = vcvt.f32.s32 %v971
    %v978 = vshll.u32 %v977, 16
    %v979 = vadd.s32 %v978, %v976
    %s980 = scalar_lea.vmem [#allocation2], 24
    %981 = vst [vmem:[%s980] sm:$0xff] %v960
    %s982 = scalar_lea.vmem %s7, 24
    %983 = vst.msk [vmem:[%s982] sm:$0xff] %vm284, %v979
    // Predicated region
    $region26: #{decoder_rnn_forward.1} parent=1 // pred_check
      _
    $region27: #{decoder_rnn_forward.1} parent=1 // pred_check_branch
      %985 = sbr.rel (0) target = $region29
    $region28: #{decoder_rnn_forward.1} parent=1 // pred_region
      %987 = vsyncadd [#allocation3], 0
      %s988 = sshll.u32 [#allocation2], 4
      %s989 = int_to_ptr.vmem [resolvable:$true] %s988
      %s990 = sshll.u32 %s6, 4
      %s991 = int_to_ptr.hbm [resolvable:$true] %s990
      %996 = dma.vmem_to_hbm [thread:$0]  %s989, 512, %s991, [#allocation3], 128, 128, 8
    $region29: #{decoder_rnn_forward.1} parent=1 // pred_fallthru
      _
    // Predicated region
    $region30: #{decoder_rnn_forward.1} parent=1 // pred_check
      _
    $region31: #{decoder_rnn_forward.1} parent=1 // pred_check_branch
      %998 = sbr.rel (0) target = $region33
    $region32: #{decoder_rnn_forward.1} parent=1 // pred_region
      _
    $region33: #{decoder_rnn_forward.1} parent=1 // pred_fallthru
      _
    // Predicated region
    $region34: #{decoder_rnn_forward.1} parent=1 // pred_check
      _
    $region35: #{decoder_rnn_forward.1} parent=1 // pred_check_branch
      %1000 = sbr.rel (0) target = $region37
    $region36: #{decoder_rnn_forward.1} parent=1 // pred_region
      %1002 = dma.done [#allocation3], 512
    $region37: #{decoder_rnn_forward.1} parent=1 // pred_fallthru
      _
    // Predicated region
    $region38: #{decoder_rnn_forward.1} parent=1 // pred_check
      _
    $region39: #{decoder_rnn_forward.1} parent=1 // pred_check_branch
      %1004 = sbr.rel (0) target = $region41
    $region40: #{decoder_rnn_forward.1} parent=1 // pred_region
      _
    $region41: #{decoder_rnn_forward.1} parent=1 // pred_fallthru
      _
    %1005 = vsyncpa [#allocation3], 1

</llo_original>
